<compile_context>
chip_gen: v7x
topology: tpu7x:2x2x1
jax: 0.10.0
libtpu: 0.0.40
codegen_flags: <defaults>
</compile_context>

<pallas_src>
import jax
import jax.numpy as jnp
from jax.experimental import pallas as pl
from jax.experimental.pallas import tpu as pltpu

C = 20  # number of classes, fixed by the module's CE class-weight vector

CLASS_WEIGHT = jnp.array(
    [0.80777327, 1.00125961, 0.90997236, 1.10867908, 1.17541499,
     0.86041422, 1.01116758, 0.89290045, 1.12410812, 0.91105395,
     1.07604013, 1.1247061, 1.09895196, 0.90172057, 0.93529453,
     0.93054733, 1.04919178, 1.04937547, 1.06267568, 1.06365688],
    dtype=jnp.float32)


# ---------------------------------------------------------------------------
# Glue: bilinear upsampling with align_corners=True (gather + lerp in plain JAX)
# ---------------------------------------------------------------------------
def _interp_coords(src, dst):
    if dst == 1:
        coords = jnp.zeros((1,), jnp.float32)
    else:
        coords = jnp.arange(dst, dtype=jnp.float32) * ((src - 1) / (dst - 1))
    i0 = jnp.clip(jnp.floor(coords).astype(jnp.int32), 0, src - 1)
    i1 = jnp.clip(i0 + 1, 0, src - 1)
    w = coords - i0.astype(jnp.float32)
    return i0, i1, w


def bilinear_align_corners(x, out_h, out_w):
    # x: [B, C, H, W] -> [B, C, out_h, out_w]; matches F.interpolate(..., align_corners=True)
    _, _, H, W = x.shape
    y0, y1, wy = _interp_coords(H, out_h)
    x0, x1, wx = _interp_coords(W, out_w)
    rows = (x[:, :, y0, :] * (1.0 - wy)[None, None, :, None]
            + x[:, :, y1, :] * wy[None, None, :, None])
    out = (rows[:, :, :, x0] * (1.0 - wx)[None, None, None, :]
           + rows[:, :, :, x1] * wx[None, None, None, :])
    return out


# ---------------------------------------------------------------------------
# Kernel 1 (fused): Lovasz sort keys + bf16 fg + per-tile gts + weighted CE terms.
# Layout: (C, tile_p) blocks, pixels on lanes, classes on sublanes.
# Padded pixels carry tgt = -1 -> one-hot is all-zero, all terms forced to 0.
# ---------------------------------------------------------------------------
def _prep_ce_kernel(lm_ref, ld_ref, tgt_ref, w_ref,
                    neg_err_ref, fg_ref, gts_ref, wnll_ref, wsum_ref):
    lm = lm_ref[...]                           # (C, TP) main logits, f32
    ld = ld_ref[...]                           # (C, TP) dsn logits, f32
    tgt = tgt_ref[...]                         # (1, TP) int32 (-1 = padded)
    w = w_ref[...]                             # (C, 1)  class weights

    cls = jax.lax.broadcasted_iota(jnp.int32, (lm.shape[0], 1), 0)   # class id / sublane
    onehot = (cls == tgt).astype(jnp.float32)                        # (C, TP)
    valid = tgt >= 0                                                 # (1, TP)

    # Lovasz branch: softmax over classes (sublane reduce) + |fg - p_c|
    m = jnp.max(lm, axis=0, keepdims=True)
    e = jnp.exp(lm - m)
    inv = pl.reciprocal(jnp.sum(e, axis=0, keepdims=True), approx=True)   # EUP, ~free
    err = jnp.abs(onehot - e * inv)
    # negated errors: ascending lax.sort in the wrapper == descending error sort
    neg_err_ref[...] = jnp.where(valid, -err, 0.0)

    # bf16 fg (exact for {0,1}) + per-tile fg totals (broadcast over 128 lanes)
    fg_ref[...] = onehot.astype(jnp.bfloat16)
    gts_ref[...] = jnp.broadcast_to(jnp.sum(onehot, axis=1, keepdims=True),
                                    gts_ref.shape)

    # deep-supervision branch: weighted cross-entropy per-pixel terms
    md = jnp.max(ld, axis=0, keepdims=True)
    zd = ld - md
    lse = jnp.log(jnp.sum(jnp.exp(zd), axis=0, keepdims=True))
    logp_t = jnp.sum(onehot * zd, axis=0, keepdims=True) - lse       # (1, TP)
    w_t = jnp.sum(onehot * w, axis=0, keepdims=True)                 # (1, TP), 0 on padded
    wnll_ref[...] = -w_t * logp_t
    wsum_ref[...] = w_t


# ---------------------------------------------------------------------------
# Kernel 2: big-block Lovasz reduction.
#   per grid step : (C, BP) block; inner fori_loop over BP//T chunks
#   cumsum/chunk  : (C,T) bf16 fg @ (T,T) bf16 upper-triangular constant (MXU)
#   cumsum across : loop-carried per-class fg count; VMEM carry only across grid steps
#   lovasz_grad   : single-division closed form
#       a = gts - cum_prev ; d = a + i0 ; grad = (a + fg*(i0+1)) / max(d*(d+1), 1)
#     (exact vs. jaccard(i)-jaccard(i-1); the only 0/0 case is the first global
#      element of an absent class, overridden to 1 like the reference.)
# ---------------------------------------------------------------------------
def _lovasz_reduce_kernel(neg_err_ref, fg_ref, gts_ref, loss_ref,
                          carry_ref, acc_ref, tri_ref):
    t = pl.program_id(0)
    Cc, BP = neg_err_ref.shape
    T = tri_ref.shape[0]
    n_chunks = BP // T

    @pl.when(t == 0)
    def _():
        carry_ref[...] = jnp.zeros_like(carry_ref)
        acc_ref[...] = jnp.zeros_like(acc_ref)
        row = jax.lax.broadcasted_iota(jnp.int32, (T, T), 0)
        col = jax.lax.broadcasted_iota(jnp.int32, (T, T), 1)
        tri_ref[...] = (row <= col).astype(tri_ref.dtype)   # built once, lives in VMEM

    gts = gts_ref[...]                                       # (C, 1) total fg per class
    tri = tri_ref[...]                                       # (T, T) bf16 upper-tri
    lane = jax.lax.broadcasted_iota(jnp.int32, (1, T), 1)    # hoisted lane iota
    absent = gts == 0.0                                      # (C, 1)

    def body(j, carry):
        base, acc = carry                                    # (C,1) running fg / loss acc
        off = j * T
        start = pl.multiple_of(off, T)
        fg_bf = fg_ref[:, pl.ds(start, T)]                   # (C, T) bf16 {0,1}
        neg = neg_err_ref[:, pl.ds(start, T)]                # (C, T) f32, -err sorted
        fg32 = fg_bf.astype(jnp.float32)

        cum = base + jnp.dot(fg_bf, tri, preferred_element_type=jnp.float32)
        cum_prev = cum - fg32
        idx0 = (t * BP + off + lane).astype(jnp.float32)     # global 0-based pixel index

        a = gts - cum_prev
        d = a + idx0
        dd = jnp.maximum(d * (d + 1.0), 1.0)                 # clamp -> no 0/0
        grad = (a + fg32 * (idx0 + 1.0)) / dd
        grad = jnp.where(jnp.logical_and(idx0 == 0.0, absent), 1.0, grad)

        acc = acc + jnp.sum(neg * grad, axis=1, keepdims=True)   # -(err . lovasz_grad)
        return (cum[:, T - 1:T], acc)                             # new running fg count

    base0 = carry_ref[:, 0:1]
    base, acc = jax.lax.fori_loop(
        0, n_chunks, body, (base0, jnp.zeros((Cc, 1), jnp.float32)))

    carry_ref[:, 0:1] = base
    acc_ref[:, 0:1] += acc

    @pl.when(t == pl.num_programs(0) - 1)
    def _():
        # mean over classes; acc holds -(err . grad) so negate once here
        loss_ref[...] = -jnp.sum(acc_ref[:, 0:1], axis=0, keepdims=True) * (1.0 / Cc)


# ---------------------------------------------------------------------------
# Wrapper (forward pass of LovaszSoftmaxLoss with default config)
# ---------------------------------------------------------------------------
def lovasz_softmax_loss(preds, targets, class_weight=CLASS_WEIGHT,
                        tile_p=16384, chunk=256):
    # tile_p: lane width of both passes (16384 keeps double-buffered VMEM well under
    #         the v7x 64 MiB part; v5e/v6e could go higher).
    # chunk : cumsum tile depth T; 256 matches the v6e/v7x 256x256 MXU (use 128 on v5e).
    pred0, pred1 = preds
    B, H, W = targets.shape
    Cc = pred0.shape[1]
    assert tile_p % chunk == 0 and chunk % 128 == 0

    logits_main = bilinear_align_corners(pred0.astype(jnp.float32), H, W)
    logits_dsn = bilinear_align_corners(pred1.astype(jnp.float32), H, W)

    # lane-dense [C, P] layout: pixels on the lane axis, classes on sublanes
    lm = jnp.transpose(logits_main, (1, 0, 2, 3)).reshape(Cc, -1)
    ld = jnp.transpose(logits_dsn, (1, 0, 2, 3)).reshape(Cc, -1)
    tgt = targets.reshape(1, -1).astype(jnp.int32)
    P = lm.shape[1]

    # shrink the tile for small inputs (keeps padding bounded, stays chunk-aligned)
    tile_p = min(tile_p, ((P + chunk - 1) // chunk) * chunk)
    P_pad = ((P + tile_p - 1) // tile_p) * tile_p
    if P_pad != P:
        pad = P_pad - P
        lm = jnp.pad(lm, ((0, 0), (0, pad)))
        ld = jnp.pad(ld, ((0, 0), (0, pad)))
        tgt = jnp.pad(tgt, ((0, 0), (0, pad)), constant_values=-1)

    n_tiles = P_pad // tile_p
    w2d = class_weight.reshape(Cc, 1).astype(jnp.float32)

    neg_err, fg, gts_part, wnll, wsum = pl.pallas_call(
        _prep_ce_kernel,
        out_shape=(jax.ShapeDtypeStruct((Cc, P_pad), jnp.float32),
                   jax.ShapeDtypeStruct((Cc, P_pad), jnp.bfloat16),
                   jax.ShapeDtypeStruct((Cc, 128 * n_tiles), jnp.float32),
                   jax.ShapeDtypeStruct((1, P_pad), jnp.float32),
                   jax.ShapeDtypeStruct((1, P_pad), jnp.float32)),
        grid=(n_tiles,),
        in_specs=[pl.BlockSpec((Cc, tile_p), lambda i: (0, i)),
                  pl.BlockSpec((Cc, tile_p), lambda i: (0, i)),
                  pl.BlockSpec((1, tile_p), lambda i: (0, i)),
                  pl.BlockSpec((Cc, 1), lambda i: (0, 0))],
        out_specs=(pl.BlockSpec((Cc, tile_p), lambda i: (0, i)),
                   pl.BlockSpec((Cc, tile_p), lambda i: (0, i)),
                   pl.BlockSpec((Cc, 128), lambda i: (0, i)),
                   pl.BlockSpec((1, tile_p), lambda i: (0, i)),
                   pl.BlockSpec((1, tile_p), lambda i: (0, i))),
        compiler_params=pltpu.CompilerParams(
            dimension_semantics=("parallel",),
            vmem_limit_bytes=40 * 1024 * 1024),
    )(lm, ld, tgt, w2d)

    # total fg per class from the per-tile partials (lane 0 of each 128-lane group)
    gts = jnp.sum(gts_part[:, ::128], axis=1, keepdims=True)

    # Descending error sort per class along the last axis; bf16 fg carried as a value.
    # TODO(synk): tie ordering may differ from torch.sort(descending=True) for exactly
    # equal error values (contribution-invariant, numerically negligible).
    neg_err_sorted, fg_sorted = jax.lax.sort(
        (neg_err, fg), dimension=1, num_keys=1, is_stable=False)

    loss_lovasz = pl.pallas_call(
        _lovasz_reduce_kernel,
        out_shape=jax.ShapeDtypeStruct((1, 1), jnp.float32),
        grid=(P_pad // tile_p,),
        in_specs=[pl.BlockSpec((Cc, tile_p), lambda t: (0, t)),
                  pl.BlockSpec((Cc, tile_p), lambda t: (0, t)),
                  pl.BlockSpec((Cc, 1), lambda t: (0, 0))],
        out_specs=pl.BlockSpec((1, 1), lambda t: (0, 0)),
        scratch_shapes=[pltpu.VMEM((Cc, 128), jnp.float32),       # cross-step fg carry
                        pltpu.VMEM((Cc, 128), jnp.float32),       # per-class loss acc
                        pltpu.VMEM((chunk, chunk), jnp.bfloat16)],  # upper-tri constant
        compiler_params=pltpu.CompilerParams(
            dimension_semantics=("arbitrary",),
            vmem_limit_bytes=40 * 1024 * 1024),
    )(neg_err_sorted, fg_sorted, gts)[0, 0]

    # weighted CE mean (padded pixels contribute 0 to both sums)
    loss_dsn = jnp.sum(wnll) / jnp.sum(wsum)

    return loss_lovasz + 0.4 * loss_dsn


# ---------------------------------------------------------------------------
# Pure-JAX reference (mirrors the PyTorch forward) for a correctness check
# ---------------------------------------------------------------------------
def _reference_loss(preds, targets, class_weight):
    pred0, pred1 = preds
    B, H, W = targets.shape
    Cc = pred0.shape[1]
    probs = jax.nn.softmax(bilinear_align_corners(pred0.astype(jnp.float32), H, W), axis=1)
    probs = jnp.transpose(probs, (0, 2, 3, 1)).reshape(-1, Cc)
    tgt = targets.reshape(-1)
    losses = []
    for c in range(Cc):
        fgc = (tgt == c).astype(jnp.float32)
        errs = jnp.abs(fgc - probs[:, c])
        order = jnp.argsort(-errs)
        es, fs = errs[order], fgc[order]
        gts = fs.sum()
        inter = gts - jnp.cumsum(fs)
        union = gts + jnp.cumsum(1.0 - fs)
        jac = 1.0 - inter / union
        jac = jnp.concatenate([jac[:1], jac[1:] - jac[:-1]])
        losses.append(jnp.dot(es, jac))
    loss = jnp.mean(jnp.stack(losses))
    ld = jnp.transpose(bilinear_align_corners(pred1.astype(jnp.float32), H, W),
                       (0, 2, 3, 1)).reshape(-1, Cc)
    logp = jax.nn.log_softmax(ld, axis=1)
    lp_t = jnp.take_along_axis(logp, tgt[:, None], axis=1)[:, 0]
    w_t = class_weight[tgt]
    loss_dsn = jnp.sum(-w_t * lp_t) / jnp.sum(w_t)
    return loss + 0.4 * loss_dsn


if __name__ == "__main__":
    key = jax.random.PRNGKey(0)
    k0, k1, k2 = jax.random.split(key, 3)
    B, H, W = 2, 16, 16          # targets spatial size -> P = 512
    h0, w0 = 8, 8                # deep-supervision logits come at lower resolution
    pred0 = jax.random.normal(k0, (B, C, h0, w0), dtype=jnp.float32)
    pred1 = jax.random.normal(k1, (B, C, h0, w0), dtype=jnp.float32)
    targets = jax.random.randint(k2, (B, H, W), 0, C, dtype=jnp.int32)

    loss = jax.block_until_ready(jax.jit(lovasz_softmax_loss)((pred0, pred1), targets))
    ref = jax.block_until_ready(_reference_loss((pred0, pred1), targets, CLASS_WEIGHT))

    assert bool(jnp.isfinite(loss)), float(loss)
    assert abs(float(loss) - float(ref)) < 1e-3, (float(loss), float(ref))
    print("KERNEL_OK")
</pallas_src>

<mosaic_0001>
module attributes {stable_mosaic.version = 11 : i64} {
  func.func @_prep_ce_kernel(%arg0: i32, %arg1: memref<20x512xf32, #tpu.memory_space<vmem>>, %arg2: memref<20x512xf32, #tpu.memory_space<vmem>>, %arg3: memref<1x512xi32, #tpu.memory_space<vmem>>, %arg4: memref<20x1xf32, #tpu.memory_space<vmem>>, %arg5: memref<20x512xf32, #tpu.memory_space<vmem>>, %arg6: memref<20x512xbf16, #tpu.memory_space<vmem>>, %arg7: memref<20x128xf32, #tpu.memory_space<vmem>>, %arg8: memref<1x512xf32, #tpu.memory_space<vmem>>, %arg9: memref<1x512xf32, #tpu.memory_space<vmem>>) attributes {dimension_semantics = [#tpu.dimension_semantics<parallel>], iteration_bounds = array<i64: 1>, scalar_prefetch = 0 : i64, scratch_operands = 0 : i64, tpu.core_type = #tpu.core_type<tc>, window_params = [{transform_indices = @transform_0, window_bounds = array<i64: 20, 512>}, {transform_indices = @transform_1, window_bounds = array<i64: 20, 512>}, {transform_indices = @transform_2, window_bounds = array<i64: 1, 512>}, {pipeline_mode = #tpu.pipeline_mode<synchronous>, transform_indices = @transform_3, window_bounds = array<i64: 20, 1>}, {transform_indices = @transform_4, window_bounds = array<i64: 20, 512>}, {transform_indices = @transform_5, window_bounds = array<i64: 20, 512>}, {transform_indices = @transform_6, window_bounds = array<i64: 20, 128>}, {transform_indices = @transform_7, window_bounds = array<i64: 1, 512>}, {transform_indices = @transform_8, window_bounds = array<i64: 1, 512>}]} {
    %c0 = arith.constant 0 : index
    %c0_0 = arith.constant 0 : index
    %0 = vector.load %arg1[%c0, %c0_0] : memref<20x512xf32, #tpu.memory_space<vmem>>, vector<20x512xf32>
    %c0_1 = arith.constant 0 : index
    %c0_2 = arith.constant 0 : index
    %1 = vector.load %arg2[%c0_1, %c0_2] : memref<20x512xf32, #tpu.memory_space<vmem>>, vector<20x512xf32>
    %c0_3 = arith.constant 0 : index
    %c0_4 = arith.constant 0 : index
    %2 = vector.load %arg3[%c0_3, %c0_4] : memref<1x512xi32, #tpu.memory_space<vmem>>, vector<1x512xi32>
    %c0_5 = arith.constant 0 : index
    %c0_6 = arith.constant 0 : index
    %3 = vector.load %arg4[%c0_5, %c0_6] : memref<20x1xf32, #tpu.memory_space<vmem>>, vector<20x1xf32>
    %4 = tpu.iota {dimensions = array<i32: 0>} : vector<20x1xi32>
    %5 = vector.broadcast %4 : vector<20x1xi32> to vector<20x512xi32>
    %6 = vector.broadcast %2 : vector<1x512xi32> to vector<20x512xi32>
    %7 = arith.cmpi eq, %5, %6 : vector<20x512xi32>
    %8 = arith.extui %7 : vector<20x512xi1> to vector<20x512xi32>
    %9 = arith.sitofp %8 : vector<20x512xi32> to vector<20x512xf32>
    %c0_i32 = arith.constant 0 : i32
    %10 = vector.broadcast %c0_i32 : i32 to vector<1x512xi32>
    %11 = arith.cmpi sge, %2, %10 : vector<1x512xi32>
    %cst = arith.constant dense<0xFF800000> : vector<512xf32>
    %12 = vector.multi_reduction <maximumf>, %0, %cst [0] : vector<20x512xf32> to vector<512xf32>
    %13 = vector.shape_cast %12 : vector<512xf32> to vector<1x512xf32>
    %14 = vector.broadcast %13 : vector<1x512xf32> to vector<20x512xf32>
    %15 = arith.subf %0, %14 : vector<20x512xf32>
    %16 = math.exp %15 : vector<20x512xf32>
    %cst_7 = arith.constant dense<0.000000e+00> : vector<512xf32>
    %17 = vector.multi_reduction <add>, %16, %cst_7 [0] : vector<20x512xf32> to vector<512xf32>
    %18 = vector.shape_cast %17 : vector<512xf32> to vector<1x512xf32>
    %19 = tpu.reciprocal %18 {approx = true} : vector<1x512xf32> -> vector<1x512xf32>
    %20 = vector.broadcast %19 : vector<1x512xf32> to vector<20x512xf32>
    %21 = arith.mulf %16, %20 : vector<20x512xf32>
    %22 = arith.subf %9, %21 : vector<20x512xf32>
    %23 = math.absf %22 : vector<20x512xf32>
    %cst_8 = arith.constant 0.000000e+00 : f32
    %24 = vector.broadcast %cst_8 : f32 to vector<20x512xf32>
    %25 = arith.subf %24, %23 : vector<20x512xf32>
    %cst_9 = arith.constant 0.000000e+00 : f32
    %26 = vector.shape_cast %11 : vector<1x512xi1> to vector<1x512xi1>
    %27 = vector.broadcast %26 : vector<1x512xi1> to vector<20x512xi1>
    %28 = vector.broadcast %cst_9 : f32 to vector<20x512xf32>
    %29 = arith.select %27, %25, %28 : vector<20x512xi1>, vector<20x512xf32>
    %c0_10 = arith.constant 0 : index
    %c0_11 = arith.constant 0 : index
    %30 = vector.load %arg5[%c0_10, %c0_11] : memref<20x512xf32, #tpu.memory_space<vmem>>, vector<20x512xf32>
    tpu.vector_store %arg5[%c0_10, %c0_11], %29 {strides = array<i32>} : memref<20x512xf32, #tpu.memory_space<vmem>>, vector<20x512xf32>,
    %31 = arith.truncf %9 : vector<20x512xf32> to vector<20x512xbf16>
    %c0_12 = arith.constant 0 : index
    %c0_13 = arith.constant 0 : index
    %32 = vector.load %arg6[%c0_12, %c0_13] : memref<20x512xbf16, #tpu.memory_space<vmem>>, vector<20x512xbf16>
    tpu.vector_store %arg6[%c0_12, %c0_13], %31 {strides = array<i32>} : memref<20x512xbf16, #tpu.memory_space<vmem>>, vector<20x512xbf16>,
    %cst_14 = arith.constant dense<0.000000e+00> : vector<20xf32>
    %33 = vector.multi_reduction <add>, %9, %cst_14 [1] : vector<20x512xf32> to vector<20xf32>
    %34 = vector.shape_cast %33 : vector<20xf32> to vector<20x1xf32>
    %35 = vector.shape_cast %34 : vector<20x1xf32> to vector<20x1xf32>
    %36 = vector.broadcast %35 : vector<20x1xf32> to vector<20x128xf32>
    %c0_15 = arith.constant 0 : index
    %c0_16 = arith.constant 0 : index
    %37 = vector.load %arg7[%c0_15, %c0_16] : memref<20x128xf32, #tpu.memory_space<vmem>>, vector<20x128xf32>
    tpu.vector_store %arg7[%c0_15, %c0_16], %36 {strides = array<i32>} : memref<20x128xf32, #tpu.memory_space<vmem>>, vector<20x128xf32>,
    %cst_17 = arith.constant dense<0xFF800000> : vector<512xf32>
    %38 = vector.multi_reduction <maximumf>, %1, %cst_17 [0] : vector<20x512xf32> to vector<512xf32>
    %39 = vector.shape_cast %38 : vector<512xf32> to vector<1x512xf32>
    %40 = vector.broadcast %39 : vector<1x512xf32> to vector<20x512xf32>
    %41 = arith.subf %1, %40 : vector<20x512xf32>
    %42 = math.exp %41 : vector<20x512xf32>
    %cst_18 = arith.constant dense<0.000000e+00> : vector<512xf32>
    %43 = vector.multi_reduction <add>, %42, %cst_18 [0] : vector<20x512xf32> to vector<512xf32>
    %44 = vector.shape_cast %43 : vector<512xf32> to vector<1x512xf32>
    %45 = math.log %44 : vector<1x512xf32>
    %46 = arith.mulf %9, %41 : vector<20x512xf32>
    %cst_19 = arith.constant dense<0.000000e+00> : vector<512xf32>
    %47 = vector.multi_reduction <add>, %46, %cst_19 [0] : vector<20x512xf32> to vector<512xf32>
    %48 = vector.shape_cast %47 : vector<512xf32> to vector<1x512xf32>
    %49 = arith.subf %48, %45 : vector<1x512xf32>
    %50 = vector.broadcast %3 : vector<20x1xf32> to vector<20x512xf32>
    %51 = arith.mulf %9, %50 : vector<20x512xf32>
    %cst_20 = arith.constant dense<0.000000e+00> : vector<512xf32>
    %52 = vector.multi_reduction <add>, %51, %cst_20 [0] : vector<20x512xf32> to vector<512xf32>
    %53 = vector.shape_cast %52 : vector<512xf32> to vector<1x512xf32>
    %cst_21 = arith.constant 0.000000e+00 : f32
    %54 = vector.broadcast %cst_21 : f32 to vector<1x512xf32>
    %55 = arith.subf %54, %53 : vector<1x512xf32>
    %56 = arith.mulf %55, %49 : vector<1x512xf32>
    %c0_22 = arith.constant 0 : index
    %c0_23 = arith.constant 0 : index
    %57 = vector.load %arg8[%c0_22, %c0_23] : memref<1x512xf32, #tpu.memory_space<vmem>>, vector<1x512xf32>
    tpu.vector_store %arg8[%c0_22, %c0_23], %56 {strides = array<i32>} : memref<1x512xf32, #tpu.memory_space<vmem>>, vector<1x512xf32>,
    %c0_24 = arith.constant 0 : index
    %c0_25 = arith.constant 0 : index
    %58 = vector.load %arg9[%c0_24, %c0_25] : memref<1x512xf32, #tpu.memory_space<vmem>>, vector<1x512xf32>
    tpu.vector_store %arg9[%c0_24, %c0_25], %53 {strides = array<i32>} : memref<1x512xf32, #tpu.memory_space<vmem>>, vector<1x512xf32>,
    return
  }
  func.func @transform_0(%arg0: i32) -> (i32, i32) {
    %c0_i32 = arith.constant 0 : i32
    %c0_i32_0 = arith.constant 0 : i32
    return %c0_i32, %arg0 : i32, i32
  }
  func.func @transform_1(%arg0: i32) -> (i32, i32) {
    %c0_i32 = arith.constant 0 : i32
    %c0_i32_0 = arith.constant 0 : i32
    return %c0_i32, %arg0 : i32, i32
  }
  func.func @transform_2(%arg0: i32) -> (i32, i32) {
    %c0_i32 = arith.constant 0 : i32
    %c0_i32_0 = arith.constant 0 : i32
    return %c0_i32, %arg0 : i32, i32
  }
  func.func @transform_3(%arg0: i32) -> (i32, i32) {
    %c0_i32 = arith.constant 0 : i32
    %c0_i32_0 = arith.constant 0 : i32
    %c0_i32_1 = arith.constant 0 : i32
    return %c0_i32, %c0_i32_0 : i32, i32
  }
  func.func @transform_4(%arg0: i32) -> (i32, i32) {
    %c0_i32 = arith.constant 0 : i32
    %c0_i32_0 = arith.constant 0 : i32
    return %c0_i32, %arg0 : i32, i32
  }
  func.func @transform_5(%arg0: i32) -> (i32, i32) {
    %c0_i32 = arith.constant 0 : i32
    %c0_i32_0 = arith.constant 0 : i32
    return %c0_i32, %arg0 : i32, i32
  }
  func.func @transform_6(%arg0: i32) -> (i32, i32) {
    %c0_i32 = arith.constant 0 : i32
    %c0_i32_0 = arith.constant 0 : i32
    return %c0_i32, %arg0 : i32, i32
  }
  func.func @transform_7(%arg0: i32) -> (i32, i32) {
    %c0_i32 = arith.constant 0 : i32
    %c0_i32_0 = arith.constant 0 : i32
    return %c0_i32, %arg0 : i32, i32
  }
  func.func @transform_8(%arg0: i32) -> (i32, i32) {
    %c0_i32 = arith.constant 0 : i32
    %c0_i32_0 = arith.constant 0 : i32
    return %c0_i32, %arg0 : i32, i32
  }
}

module attributes {stable_mosaic.version = 11 : i64} {
  func.func @_lovasz_reduce_kernel(%arg0: i32, %arg1: memref<20x512xf32, #tpu.memory_space<vmem>>, %arg2: memref<20x512xbf16, #tpu.memory_space<vmem>>, %arg3: memref<20x1xf32, #tpu.memory_space<vmem>>, %arg4: memref<1x1xf32, #tpu.memory_space<vmem>>, %arg5: memref<20x128xf32, #tpu.memory_space<vmem>>, %arg6: memref<20x128xf32, #tpu.memory_space<vmem>>, %arg7: memref<256x256xbf16, #tpu.memory_space<vmem>>) attributes {dimension_semantics = [#tpu.dimension_semantics<arbitrary>], iteration_bounds = array<i64: 1>, scalar_prefetch = 0 : i64, scratch_operands = 3 : i64, tpu.core_type = #tpu.core_type<tc>, window_params = [{transform_indices = @transform_0, window_bounds = array<i64: 20, 512>}, {transform_indices = @transform_1, window_bounds = array<i64: 20, 512>}, {pipeline_mode = #tpu.pipeline_mode<synchronous>, transform_indices = @transform_2, window_bounds = array<i64: 20, 1>}, {pipeline_mode = #tpu.pipeline_mode<synchronous>, transform_indices = @transform_3, window_bounds = array<i64: 1, 1>}]} {
    %c0_i32 = arith.constant 0 : i32
    %0 = arith.cmpi eq, %arg0, %c0_i32 : i32
    %1 = arith.extui %0 : i1 to i32
    %c0_i32_0 = arith.constant 0 : i32
    %2 = arith.cmpi ne, %1, %c0_i32_0 : i32
    scf.if %2 {
      %cst_17 = arith.constant 0.000000e+00 : f32
      %19 = vector.broadcast %cst_17 : f32 to vector<20x128xf32>
      %c0_18 = arith.constant 0 : index
      %c0_19 = arith.constant 0 : index
      %20 = vector.load %arg5[%c0_18, %c0_19] : memref<20x128xf32, #tpu.memory_space<vmem>>, vector<20x128xf32>
      tpu.vector_store %arg5[%c0_18, %c0_19], %19 {strides = array<i32>} : memref<20x128xf32, #tpu.memory_space<vmem>>, vector<20x128xf32>,
      %cst_20 = arith.constant 0.000000e+00 : f32
      %21 = vector.broadcast %cst_20 : f32 to vector<20x128xf32>
      %c0_21 = arith.constant 0 : index
      %c0_22 = arith.constant 0 : index
      %22 = vector.load %arg6[%c0_21, %c0_22] : memref<20x128xf32, #tpu.memory_space<vmem>>, vector<20x128xf32>
      tpu.vector_store %arg6[%c0_21, %c0_22], %21 {strides = array<i32>} : memref<20x128xf32, #tpu.memory_space<vmem>>, vector<20x128xf32>,
      %23 = tpu.iota {dimensions = array<i32: 0>} : vector<256x256xi32>
      %24 = tpu.iota {dimensions = array<i32: 1>} : vector<256x256xi32>
      %25 = arith.cmpi sle, %23, %24 : vector<256x256xi32>
      %26 = arith.extui %25 : vector<256x256xi1> to vector<256x256xi32>
      %27 = arith.sitofp %26 : vector<256x256xi32> to vector<256x256xf32>
      %28 = arith.truncf %27 : vector<256x256xf32> to vector<256x256xbf16>
      %c0_23 = arith.constant 0 : index
      %c0_24 = arith.constant 0 : index
      %29 = vector.load %arg7[%c0_23, %c0_24] : memref<256x256xbf16, #tpu.memory_space<vmem>>, vector<256x256xbf16>
      tpu.vector_store %arg7[%c0_23, %c0_24], %28 {strides = array<i32>} : memref<256x256xbf16, #tpu.memory_space<vmem>>, vector<256x256xbf16>,
    } else {
    }
    %c0 = arith.constant 0 : index
    %c0_1 = arith.constant 0 : index
    %3 = vector.load %arg3[%c0, %c0_1] : memref<20x1xf32, #tpu.memory_space<vmem>>, vector<20x1xf32>
    %c0_2 = arith.constant 0 : index
    %c0_3 = arith.constant 0 : index
    %4 = vector.load %arg7[%c0_2, %c0_3] : memref<256x256xbf16, #tpu.memory_space<vmem>>, vector<256x256xbf16>
    %5 = tpu.iota {dimensions = array<i32: 1>} : vector<1x256xi32>
    %cst = arith.constant 0.000000e+00 : f32
    %6 = vector.broadcast %cst : f32 to vector<20x1xf32>
    %7 = arith.cmpf oeq, %3, %6 : vector<20x1xf32>
    %c0_4 = arith.constant 0 : index
    %c0_5 = arith.constant 0 : index
    %8 = vector.load %arg5[%c0_4, %c0_5] : memref<20x128xf32, #tpu.memory_space<vmem>>, vector<20x1xf32>
    %cst_6 = arith.constant 0.000000e+00 : f32
    %9 = vector.broadcast %cst_6 : f32 to vector<20x1xf32>
    %c0_i32_7 = arith.constant 0 : i32
    %c2_i32 = arith.constant 2 : i32
    %10 = arith.addi %c0_i32_7, %c2_i32 : i32
    %c1_i32 = arith.constant 1 : i32
    %11:2 = scf.for %arg8 = %c0_i32_7 to %10 step %c1_i32 iter_args(%arg9 = %8, %arg10 = %9) -> (vector<20x1xf32>, vector<20x1xf32>)  : i32 {
      %c256_i32 = arith.constant 256 : i32
      %19 = arith.muli %arg8, %c256_i32 : i32
      %20 = tpu.assume_multiple %19, 256 : i32
      %c0_17 = arith.constant 0 : index
      %21 = arith.index_cast %20 : i32 to index
      %22 = vector.load %arg2[%c0_17, %21] : memref<20x512xbf16, #tpu.memory_space<vmem>>, vector<20x256xbf16>
      %c0_18 = arith.constant 0 : index
      %23 = arith.index_cast %20 : i32 to index
      %24 = vector.load %arg1[%c0_18, %23] : memref<20x512xf32, #tpu.memory_space<vmem>>, vector<20x256xf32>
      %25 = arith.extf %22 : vector<20x256xbf16> to vector<20x256xf32>
      %cst_19 = arith.constant dense<0.000000e+00> : vector<20x256xf32>
      %26 = tpu.matmul %22, %4, %cst_19 {dimension_numbers = #tpu.dot_dimension_numbers<[1], [0], [0], [1], [0, 0, 1, 1], [], []>} : vector<20x256xbf16>, vector<256x256xbf16>, vector<20x256xf32> -> vector<20x256xf32>
      %27 = vector.broadcast %arg9 : vector<20x1xf32> to vector<20x256xf32>
      %28 = arith.addf %27, %26 : vector<20x256xf32>
      %29 = arith.subf %28, %25 : vector<20x256xf32>
      %c512_i32 = arith.constant 512 : i32
      %30 = arith.muli %arg0, %c512_i32 : i32
      %31 = arith.addi %30, %19 : i32
      %32 = vector.broadcast %31 : i32 to vector<1x256xi32>
      %33 = arith.addi %32, %5 : vector<1x256xi32>
      %34 = arith.sitofp %33 : vector<1x256xi32> to vector<1x256xf32>
      %35 = vector.broadcast %3 : vector<20x1xf32> to vector<20x256xf32>
      %36 = arith.subf %35, %29 : vector<20x256xf32>
      %37 = vector.broadcast %34 : vector<1x256xf32> to vector<20x256xf32>
      %38 = arith.addf %36, %37 : vector<20x256xf32>
      %cst_20 = arith.constant 1.000000e+00 : f32
      %39 = vector.broadcast %cst_20 : f32 to vector<20x256xf32>
      %40 = arith.addf %38, %39 : vector<20x256xf32>
      %41 = arith.mulf %38, %40 : vector<20x256xf32>
      %cst_21 = arith.constant 1.000000e+00 : f32
      %42 = vector.broadcast %cst_21 : f32 to vector<20x256xf32>
      %43 = arith.maximumf %41, %42 : vector<20x256xf32>
      %cst_22 = arith.constant 1.000000e+00 : f32
      %44 = vector.broadcast %cst_22 : f32 to vector<1x256xf32>
      %45 = arith.addf %34, %44 : vector<1x256xf32>
      %46 = vector.broadcast %45 : vector<1x256xf32> to vector<20x256xf32>
      %47 = arith.mulf %25, %46 : vector<20x256xf32>
      %48 = arith.addf %36, %47 : vector<20x256xf32>
      %49 = arith.divf %48, %43 : vector<20x256xf32>
      %cst_23 = arith.constant 0.000000e+00 : f32
      %50 = vector.broadcast %cst_23 : f32 to vector<1x256xf32>
      %51 = arith.cmpf oeq, %34, %50 : vector<1x256xf32>
      %52 = vector.broadcast %51 : vector<1x256xi1> to vector<20x256xi1>
      %53 = vector.broadcast %7 : vector<20x1xi1> to vector<20x256xi1>
      %54 = arith.andi %52, %53 : vector<20x256xi1>
      %cst_24 = arith.constant 1.000000e+00 : f32
      %55 = vector.broadcast %cst_24 : f32 to vector<20x256xf32>
      %56 = arith.select %54, %55, %49 : vector<20x256xi1>, vector<20x256xf32>
      %57 = arith.mulf %24, %56 : vector<20x256xf32>
      %cst_25 = arith.constant dense<0.000000e+00> : vector<20xf32>
      %58 = vector.multi_reduction <add>, %57, %cst_25 [1] : vector<20x256xf32> to vector<20xf32>
      %59 = vector.shape_cast %58 : vector<20xf32> to vector<20x1xf32>
      %60 = arith.addf %arg10, %59 : vector<20x1xf32>
      %61 = vector.extract_strided_slice %28 {offsets = [0, 255], sizes = [20, 1], strides = [1, 1]} : vector<20x256xf32> to vector<20x1xf32>
      scf.yield %61, %60 : vector<20x1xf32>, vector<20x1xf32>
    }
    %c2_i32_8 = arith.constant 2 : i32
    %c0_9 = arith.constant 0 : index
    %c0_10 = arith.constant 0 : index
    %12 = vector.load %arg5[%c0_9, %c0_10] : memref<20x128xf32, #tpu.memory_space<vmem>>, vector<20x1xf32>
    tpu.vector_store %arg5[%c0_9, %c0_10], %11#0 {strides = array<i32>} : memref<20x128xf32, #tpu.memory_space<vmem>>, vector<20x1xf32>,
    %c0_11 = arith.constant 0 : index
    %c0_12 = arith.constant 0 : index
    %13 = vector.load %arg6[%c0_11, %c0_12] : memref<20x128xf32, #tpu.memory_space<vmem>>, vector<20x1xf32>
    %14 = arith.addf %13, %11#1 : vector<20x1xf32>
    %c0_13 = arith.constant 0 : index
    %c0_14 = arith.constant 0 : index
    %15 = vector.load %arg6[%c0_13, %c0_14] : memref<20x128xf32, #tpu.memory_space<vmem>>, vector<20x1xf32>
    tpu.vector_store %arg6[%c0_13, %c0_14], %14 {strides = array<i32>} : memref<20x128xf32, #tpu.memory_space<vmem>>, vector<20x1xf32>,
    %c0_i32_15 = arith.constant 0 : i32
    %16 = arith.cmpi eq, %arg0, %c0_i32_15 : i32
    %17 = arith.extui %16 : i1 to i32
    %c0_i32_16 = arith.constant 0 : i32
    %18 = arith.cmpi ne, %17, %c0_i32_16 : i32
    scf.if %18 {
      %c0_17 = arith.constant 0 : index
      %c0_18 = arith.constant 0 : index
      %19 = vector.load %arg6[%c0_17, %c0_18] : memref<20x128xf32, #tpu.memory_space<vmem>>, vector<20x1xf32>
      %cst_19 = arith.constant dense<0.000000e+00> : vector<1xf32>
      %20 = vector.multi_reduction <add>, %19, %cst_19 [0] : vector<20x1xf32> to vector<1xf32>
      %21 = vector.shape_cast %20 : vector<1xf32> to vector<1x1xf32>
      %cst_20 = arith.constant 0.000000e+00 : f32
      %22 = vector.broadcast %cst_20 : f32 to vector<1x1xf32>
      %23 = arith.subf %22, %21 : vector<1x1xf32>
      %cst_21 = arith.constant 5.000000e-02 : f32
      %24 = vector.broadcast %cst_21 : f32 to vector<1x1xf32>
      %25 = arith.mulf %23, %24 : vector<1x1xf32>
      %c0_22 = arith.constant 0 : index
      %c0_23 = arith.constant 0 : index
      %26 = vector.load %arg4[%c0_22, %c0_23] : memref<1x1xf32, #tpu.memory_space<vmem>>, vector<1x1xf32>
      tpu.vector_store %arg4[%c0_22, %c0_23], %25 {strides = array<i32>} : memref<1x1xf32, #tpu.memory_space<vmem>>, vector<1x1xf32>,
    } else {
    }
    return
  }
  func.func @transform_0(%arg0: i32) -> (i32, i32) {
    %c0_i32 = arith.constant 0 : i32
    %c0_i32_0 = arith.constant 0 : i32
    return %c0_i32, %arg0 : i32, i32
  }
  func.func @transform_1(%arg0: i32) -> (i32, i32) {
    %c0_i32 = arith.constant 0 : i32
    %c0_i32_0 = arith.constant 0 : i32
    return %c0_i32, %arg0 : i32, i32
  }
  func.func @transform_2(%arg0: i32) -> (i32, i32) {
    %c0_i32 = arith.constant 0 : i32
    %c0_i32_0 = arith.constant 0 : i32
    %c0_i32_1 = arith.constant 0 : i32
    return %c0_i32, %c0_i32_0 : i32, i32
  }
  func.func @transform_3(%arg0: i32) -> (i32, i32) {
    %c0_i32 = arith.constant 0 : i32
    %c0_i32_0 = arith.constant 0 : i32
    %c0_i32_1 = arith.constant 0 : i32
    return %c0_i32, %c0_i32_0 : i32, i32
  }
}

</mosaic_0001>

<llo_original>
// kernel: lovasz_softmax_loss.2
$region0: #{lovasz_softmax_loss.2}
  #allocation0 [shape = 'u32[]', space=smem, size = 0x4, offset = 0x4, fixed_abs, tag = 'smem constant byte address 0x4 - core index']
  #allocation1 [shape = 'u32[144,128]{1,0:T(1,128)}', space=vmem, size = 0x12000, scoped, tag = 'internal scratch']
  %s0 = inlined_call_operand.vmem [shape: f32[20,512], index: 0, kind: input, shape index: {}]
  %s1 = inlined_call_operand.vmem [shape: f32[20,512], index: 1, kind: input, shape index: {}]
  %s2 = inlined_call_operand.vmem [shape: s32[1,512], index: 2, kind: input, shape index: {}]
  %s3 = inlined_call_operand.vmem [shape: f32[20,1], index: 3, kind: input, shape index: {}]
  %s4 = inlined_call_operand.vmem [shape: f32[20,512], index: 4, kind: output, shape index: {0}]
  %s5 = inlined_call_operand.vmem [shape: bf16[20,512], index: 5, kind: output, shape index: {1}]
  %s6 = inlined_call_operand.vmem [shape: f32[20,128], index: 6, kind: output, shape index: {2}]
  %s7 = inlined_call_operand.vmem [shape: f32[1,512], index: 7, kind: output, shape index: {3}]
  %s8 = inlined_call_operand.vmem [shape: f32[1,512], index: 8, kind: output, shape index: {4}]
  %9 = xla_tuple %s4, %s5, %s6, %s7, %s8
  %s10 = sld [smem:[#allocation0]]
  $region58: #{lovasz_softmax_loss.2} parent=0
    _
  %s12 = ssub.s32 1, %s10
  %s13 = scalar_select 0, %s12, %s10
  // Predicated region
  $region2: #{lovasz_softmax_loss.2} parent=0 // pred_check
    _
  $region3: #{lovasz_softmax_loss.2} parent=0 // pred_check_branch
    %15 = sbr.rel (0) target = $region5
  $region4: #{lovasz_softmax_loss.2} parent=0 // pred_region
    _
  $region5: #{lovasz_softmax_loss.2} parent=0 // pred_fallthru
    _
  // Predicated region
  $region6: #{lovasz_softmax_loss.2} parent=0 // pred_check
    _
  $region7: #{lovasz_softmax_loss.2} parent=0 // pred_check_branch
    %17 = sbr.rel (0) target = $region9
  $region8: #{lovasz_softmax_loss.2} parent=0 // pred_region
    _
  $region9: #{lovasz_softmax_loss.2} parent=0 // pred_fallthru
    _
  // Predicated region
  $region10: #{lovasz_softmax_loss.2} parent=0 // pred_check
    _
  $region11: #{lovasz_softmax_loss.2} parent=0 // pred_check_branch
    %19 = sbr.rel (0) target = $region13
  $region12: #{lovasz_softmax_loss.2} parent=0 // pred_region
    _
  $region13: #{lovasz_softmax_loss.2} parent=0 // pred_fallthru
    _
  // Predicated region
  $region14: #{lovasz_softmax_loss.2} parent=0 // pred_check
    _
  $region15: #{lovasz_softmax_loss.2} parent=0 // pred_check_branch
    %21 = sbr.rel (0) target = $region17
  $region16: #{lovasz_softmax_loss.2} parent=0 // pred_region
    _
  $region17: #{lovasz_softmax_loss.2} parent=0 // pred_fallthru
    _
  %v22 = vld [vmem:[%s0] sm:$0xff]
  %v23 = vld [vmem:[%s0 + $0x8] sm:$0xff]
  %v24 = vld [vmem:[%s0 + $0x10] sm:$0xff]
  %v25 = vld [vmem:[%s0 + $0x18] sm:$0xff]
  %v26 = vld [vmem:[%s0 + $0x20] sm:$0xff]
  %v27 = vld [vmem:[%s0 + $0x28] sm:$0xff]
  %v28 = vld [vmem:[%s0 + $0x30] sm:$0xff]
  %v29 = vld [vmem:[%s0 + $0x38] sm:$0xff]
  %v30 = vld [vmem:[%s0 + $0x40] sm:$0xf]
  %v31 = vld [vmem:[%s0 + $0x48] sm:$0xf]
  %v32 = vld [vmem:[%s0 + $0x50] sm:$0xf]
  %v33 = vld [vmem:[%s0 + $0x58] sm:$0xf]
  %v34 = vld [vmem:[%s1] sm:$0xff]
  %v35 = vld [vmem:[%s1 + $0x8] sm:$0xff]
  %v36 = vld [vmem:[%s1 + $0x10] sm:$0xff]
  %v37 = vld [vmem:[%s1 + $0x18] sm:$0xff]
  %v38 = vld [vmem:[%s1 + $0x20] sm:$0xff]
  %v39 = vld [vmem:[%s1 + $0x28] sm:$0xff]
  %v40 = vld [vmem:[%s1 + $0x30] sm:$0xff]
  %v41 = vld [vmem:[%s1 + $0x38] sm:$0xff]
  %v42 = vld [vmem:[%s1 + $0x40] sm:$0xf]
  %v43 = vld [vmem:[%s1 + $0x48] sm:$0xf]
  %v44 = vld [vmem:[%s1 + $0x50] sm:$0xf]
  %v45 = vld [vmem:[%s1 + $0x58] sm:$0xf]
  %v46 = vld [vmem:[%s2] sm:$0xf]
  %v47 = vld [vmem:[%s3] sm:$0xff]
  %v48 = vld [vmem:[%s3 + $0x8] sm:$0xff]
  %v49 = vld [vmem:[%s3 + $0x10] sm:$0xf]
  %v50 = vlaneseq
  %v51 = vshrl.u32 %v50, 7
  %v52 = vadd.s32 %v51, 8
  %v53 = vadd.s32 %v51, 16
  %v54 = vlaneseq
  %v55 = vshrl.u32 %v54, 7
  %v56 = vsub.s32 0, %v55
  %v57 = vrot.slane %v46, %v56
  %v58 = vlaneseq
  %v59 = vshrl.u32 %v58, 7
  %v60 = vsub.s32 1, %v59
  %v61 = vrot.slane %v46, %v60
  %v62 = vlaneseq
  %v63 = vshrl.u32 %v62, 7
  %v64 = vsub.s32 2, %v63
  %v65 = vrot.slane %v46, %v64
  %v66 = vlaneseq
  %v67 = vshrl.u32 %v66, 7
  %v68 = vsub.s32 3, %v67
  %v69 = vrot.slane %v46, %v68
  %vm70 = vcmp.eq.s32.totalorder %v51, %v57
  %vm71 = vcmp.eq.s32.totalorder %v51, %v61
  %vm72 = vcmp.eq.s32.totalorder %v51, %v65
  %vm73 = vcmp.eq.s32.totalorder %v51, %v69
  %vm74 = vcmp.eq.s32.totalorder %v52, %v57
  %vm75 = vcmp.eq.s32.totalorder %v52, %v61
  %vm76 = vcmp.eq.s32.totalorder %v52, %v65
  %vm77 = vcmp.eq.s32.totalorder %v52, %v69
  %vm78 = vcmp.eq.s32.totalorder %v53, %v57
  %vm79 = vcmp.eq.s32.totalorder %v53, %v61
  %vm80 = vcmp.eq.s32.totalorder %v53, %v65
  %vm81 = vcmp.eq.s32.totalorder %v53, %v69
  %v82 = vsel %vm70, 1, 0
  %v83 = vsel %vm71, 1, 0
  %v84 = vsel %vm72, 1, 0
  %v85 = vsel %vm73, 1, 0
  %v86 = vsel %vm74, 1, 0
  %v87 = vsel %vm75, 1, 0
  %v88 = vsel %vm76, 1, 0
  %v89 = vsel %vm77, 1, 0
  %v90 = vsel %vm78, 1, 0
  %v91 = vsel %vm79, 1, 0
  %v92 = vsel %vm80, 1, 0
  %v93 = vsel %vm81, 1, 0
  %v94 = vcvt.s32.f32 %v82
  %v95 = vcvt.s32.f32 %v83
  %v96 = vcvt.s32.f32 %v84
  %v97 = vcvt.s32.f32 %v85
  %v98 = vcvt.s32.f32 %v86
  %v99 = vcvt.s32.f32 %v87
  %v100 = vcvt.s32.f32 %v88
  %v101 = vcvt.s32.f32 %v89
  %v102 = vcvt.s32.f32 %v90
  %v103 = vcvt.s32.f32 %v91
  %v104 = vcvt.s32.f32 %v92
  %v105 = vcvt.s32.f32 %v93
  %vm106 = vcmp.ge.s32.totalorder %v46, 0
  %v107 = vmax.f32 %v22, %v26
  %vm108 = vcmask 1043456
  %v109 = vsel %vm108, %v30, -inf
  %v110 = vmax.f32 %v107, %v109
  %v111 = vrot.slane %v110, 4
  %v112 = vmax.f32 %v110, %v111
  %v113 = vrot.slane %v112, 2
  %v114 = vmax.f32 %v112, %v113
  %v115 = vrot.slane %v114, 1
  %v116 = vmax.f32 %v114, %v115
  %v117 = vmax.f32 %v23, %v27
  %v118 = vsel %vm108, %v31, -inf
  %v119 = vmax.f32 %v117, %v118
  %v120 = vrot.slane %v119, 4
  %v121 = vmax.f32 %v119, %v120
  %v122 = vrot.slane %v121, 2
  %v123 = vmax.f32 %v121, %v122
  %v124 = vrot.slane %v123, 1
  %v125 = vmax.f32 %v123, %v124
  %v126 = vmax.f32 %v24, %v28
  %v127 = vsel %vm108, %v32, -inf
  %v128 = vmax.f32 %v126, %v127
  %v129 = vrot.slane %v128, 4
  %v130 = vmax.f32 %v128, %v129
  %v131 = vrot.slane %v130, 2
  %v132 = vmax.f32 %v130, %v131
  %v133 = vrot.slane %v132, 1
  %v134 = vmax.f32 %v132, %v133
  %v135 = vmax.f32 %v25, %v29
  %v136 = vsel %vm108, %v33, -inf
  %v137 = vmax.f32 %v135, %v136
  %v138 = vrot.slane %v137, 4
  %v139 = vmax.f32 %v137, %v138
  %v140 = vrot.slane %v139, 2
  %v141 = vmax.f32 %v139, %v140
  %v142 = vrot.slane %v141, 1
  %v143 = vmax.f32 %v141, %v142
  %v144 = vsub.f32 %v22, %v116
  %v145 = vsub.f32 %v23, %v125
  %v146 = vsub.f32 %v24, %v134
  %v147 = vsub.f32 %v25, %v143
  %v148 = vsub.f32 %v26, %v116
  %v149 = vsub.f32 %v27, %v125
  %v150 = vsub.f32 %v28, %v134
  %v151 = vsub.f32 %v29, %v143
  %v152 = vsub.f32 %v30, %v116
  %v153 = vsub.f32 %v31, %v125
  %v154 = vsub.f32 %v32, %v134
  %v155 = vsub.f32 %v33, %v143
  %v156 = vmul.f32 %v144, 1.442695
  %v157 = vpow.pop %v156
  %v158 = vmul.f32 %v145, 1.442695
  %v159 = vpow.pop %v158
  %v160 = vmul.f32 %v146, 1.442695
  %v161 = vpow.pop %v160
  %v162 = vmul.f32 %v147, 1.442695
  %v163 = vpow.pop %v162
  %v164 = vmul.f32 %v148, 1.442695
  %v165 = vpow.pop %v164
  %v166 = vmul.f32 %v149, 1.442695
  %v167 = vpow.pop %v166
  %v168 = vmul.f32 %v150, 1.442695
  %v169 = vpow.pop %v168
  %v170 = vmul.f32 %v151, 1.442695
  %v171 = vpow.pop %v170
  %v172 = vmul.f32 %v152, 1.442695
  %v173 = vpow.pop %v172
  %v174 = vmul.f32 %v153, 1.442695
  %v175 = vpow.pop %v174
  %v176 = vmul.f32 %v154, 1.442695
  %v177 = vpow.pop %v176
  %v178 = vmul.f32 %v155, 1.442695
  %v179 = vpow.pop %v178
  %v180 = vadd.f32 %v157, %v165
  %v181 = vsel %vm108, %v173, 0.0
  %v182 = vadd.f32 %v180, %v181
  %v183 = vrot.slane %v182, 4
  %v184 = vadd.f32 %v182, %v183
  %v185 = vrot.slane %v184, 2
  %v186 = vadd.f32 %v184, %v185
  %v187 = vrot.slane %v186, 1
  %v188 = vadd.f32 %v186, %v187
  %v189 = vadd.f32 %v159, %v167
  %v190 = vsel %vm108, %v175, 0.0
  %v191 = vadd.f32 %v189, %v190
  %v192 = vrot.slane %v191, 4
  %v193 = vadd.f32 %v191, %v192
  %v194 = vrot.slane %v193, 2
  %v195 = vadd.f32 %v193, %v194
  %v196 = vrot.slane %v195, 1
  %v197 = vadd.f32 %v195, %v196
  %v198 = vadd.f32 %v161, %v169
  %v199 = vsel %vm108, %v177, 0.0
  %v200 = vadd.f32 %v198, %v199
  %v201 = vrot.slane %v200, 4
  %v202 = vadd.f32 %v200, %v201
  %v203 = vrot.slane %v202, 2
  %v204 = vadd.f32 %v202, %v203
  %v205 = vrot.slane %v204, 1
  %v206 = vadd.f32 %v204, %v205
  %v207 = vadd.f32 %v163, %v171
  %v208 = vsel %vm108, %v179, 0.0
  %v209 = vadd.f32 %v207, %v208
  %v210 = vrot.slane %v209, 4
  %v211 = vadd.f32 %v209, %v210
  %v212 = vrot.slane %v211, 2
  %v213 = vadd.f32 %v211, %v212
  %v214 = vrot.slane %v213, 1
  %v215 = vadd.f32 %v213, %v214
  %v216 = vrcp.pop %v188
  %v217 = vrcp.pop %v197
  %v218 = vrcp.pop %v206
  %v219 = vrcp.pop %v215
  %v220 = vmul.f32 %v157, %v216
  %v221 = vmul.f32 %v159, %v217
  %v222 = vmul.f32 %v161, %v218
  %v223 = vmul.f32 %v163, %v219
  %v224 = vmul.f32 %v165, %v216
  %v225 = vmul.f32 %v167, %v217
  %v226 = vmul.f32 %v169, %v218
  %v227 = vmul.f32 %v171, %v219
  %v228 = vmul.f32 %v173, %v216
  %v229 = vmul.f32 %v175, %v217
  %v230 = vmul.f32 %v177, %v218
  %v231 = vmul.f32 %v179, %v219
  %v232 = vsub.f32 %v94, %v220
  %v233 = vsub.f32 %v95, %v221
  %v234 = vsub.f32 %v96, %v222
  %v235 = vsub.f32 %v97, %v223
  %v236 = vsub.f32 %v98, %v224
  %v237 = vsub.f32 %v99, %v225
  %v238 = vsub.f32 %v100, %v226
  %v239 = vsub.f32 %v101, %v227
  %v240 = vsub.f32 %v102, %v228
  %v241 = vsub.f32 %v103, %v229
  %v242 = vsub.f32 %v104, %v230
  %v243 = vsub.f32 %v105, %v231
  %v244 = vand.u32 2147483647, %v232
  %v245 = vand.u32 2147483647, %v233
  %v246 = vand.u32 2147483647, %v234
  %v247 = vand.u32 2147483647, %v235
  %v248 = vand.u32 2147483647, %v236
  %v249 = vand.u32 2147483647, %v237
  %v250 = vand.u32 2147483647, %v238
  %v251 = vand.u32 2147483647, %v239
  %v252 = vand.u32 2147483647, %v240
  %v253 = vand.u32 2147483647, %v241
  %v254 = vand.u32 2147483647, %v242
  %v255 = vand.u32 2147483647, %v243
  %v256 = vsub.f32 0.0, %v244
  %v257 = vsub.f32 0.0, %v245
  %v258 = vsub.f32 0.0, %v246
  %v259 = vsub.f32 0.0, %v247
  %v260 = vsub.f32 0.0, %v248
  %v261 = vsub.f32 0.0, %v249
  %v262 = vsub.f32 0.0, %v250
  %v263 = vsub.f32 0.0, %v251
  %v264 = vsub.f32 0.0, %v252
  %v265 = vsub.f32 0.0, %v253
  %v266 = vsub.f32 0.0, %v254
  %v267 = vsub.f32 0.0, %v255
  %v268 = vsel %vm106, 1, 0
  %v269 = vlaneseq
  %v270 = vshrl.u32 %v269, 7
  %v271 = vsub.s32 0, %v270
  %v272 = vrot.slane %v268, %v271
  %v273 = vlaneseq
  %v274 = vshrl.u32 %v273, 7
  %v275 = vsub.s32 1, %v274
  %v276 = vrot.slane %v268, %v275
  %v277 = vlaneseq
  %v278 = vshrl.u32 %v277, 7
  %v279 = vsub.s32 2, %v278
  %v280 = vrot.slane %v268, %v279
  %v281 = vlaneseq
  %v282 = vshrl.u32 %v281, 7
  %v283 = vsub.s32 3, %v282
  %v284 = vrot.slane %v268, %v283
  %vm285 = vcmp.eq.s32.totalorder %v272, 1
  %vm286 = vcmp.eq.s32.totalorder %v276, 1
  %vm287 = vcmp.eq.s32.totalorder %v280, 1
  %vm288 = vcmp.eq.s32.totalorder %v284, 1
  %v289 = vsel %vm285, %v256, 0.0
  %v290 = vsel %vm286, %v257, 0.0
  %v291 = vsel %vm287, %v258, 0.0
  %v292 = vsel %vm288, %v259, 0.0
  %v293 = vsel %vm285, %v260, 0.0
  %v294 = vsel %vm286, %v261, 0.0
  %v295 = vsel %vm287, %v262, 0.0
  %v296 = vsel %vm288, %v263, 0.0
  %v297 = vsel %vm285, %v264, 0.0
  %v298 = vsel %vm286, %v265, 0.0
  %v299 = vsel %vm287, %v266, 0.0
  %v300 = vsel %vm288, %v267, 0.0
  %301 = vst [vmem:[%s4] sm:$0xff] %v289
  %302 = vst [vmem:[%s4 + $0x8] sm:$0xff] %v290
  %303 = vst [vmem:[%s4 + $0x10] sm:$0xff] %v291
  %304 = vst [vmem:[%s4 + $0x18] sm:$0xff] %v292
  %305 = vst [vmem:[%s4 + $0x20] sm:$0xff] %v293
  %306 = vst [vmem:[%s4 + $0x28] sm:$0xff] %v294
  %307 = vst [vmem:[%s4 + $0x30] sm:$0xff] %v295
  %308 = vst [vmem:[%s4 + $0x38] sm:$0xff] %v296
  %309 = vst [vmem:[%s4 + $0x40] sm:$0xf] %v297
  %310 = vst [vmem:[%s4 + $0x48] sm:$0xf] %v298
  %311 = vst [vmem:[%s4 + $0x50] sm:$0xf] %v299
  %312 = vst [vmem:[%s4 + $0x58] sm:$0xf] %v300
  %v313 = vpack.c.bf16 %v98, %v94
  %v314 = vpack.c.bf16 %v99, %v95
  %v315 = vpack.c.bf16 %v100, %v96
  %v316 = vpack.c.bf16 %v101, %v97
  %v317 = vpack.c.bf16 %v102, %v102
  %v318 = vpack.c.bf16 %v103, %v103
  %v319 = vpack.c.bf16 %v104, %v104
  %v320 = vpack.c.bf16 %v105, %v105
  %v329 = vunpack.c.l.b16 %v313
  %v330 = vunpack.c.l.b16 %v314
  %v331 = vunpack.c.l.b16 %v315
  %v332 = vunpack.c.l.b16 %v316
  %v333 = vunpack.c.h.b16 %v313
  %v334 = vunpack.c.h.b16 %v314
  %v335 = vunpack.c.h.b16 %v315
  %v336 = vunpack.c.h.b16 %v316
  %v337 = vunpack.c.l.b16 %v317
  %v338 = vunpack.c.l.b16 %v318
  %v339 = vunpack.c.l.b16 %v319
  %v340 = vunpack.c.l.b16 %v320
  %v341 = vpack.c.b16 %v330, %v329
  %v342 = vpack.c.b16 %v332, %v331
  %v343 = vpack.c.b16 %v334, %v333
  %v344 = vpack.c.b16 %v336, %v335
  %v345 = vpack.c.b16 %v338, %v337
  %v346 = vpack.c.b16 %v340, %v339
  %353 = vst [vmem:[%s5] sm:$0xff] %v341
  %354 = vst [vmem:[%s5 + $0x8] sm:$0xff] %v342
  %355 = vst [vmem:[%s5 + $0x10] sm:$0xff] %v343
  %356 = vst [vmem:[%s5 + $0x18] sm:$0xff] %v344
  %357 = vst [vmem:[%s5 + $0x20] sm:$0x33] %v345
  %358 = vst [vmem:[%s5 + $0x28] sm:$0x33] %v346
  %v359 = vadd.f32 %v94, %v95
  %v360 = vadd.f32 %v359, %v96
  %v361 = vadd.f32 %v360, %v97
  %362 = vadd.xlane.f32.xlu0 %v361
  %v363 = vpop.xlane.xlu0 %362
  %v364 = vadd.f32 %v98, %v99
  %v365 = vadd.f32 %v364, %v100
  %v366 = vadd.f32 %v365, %v101
  %367 = vadd.xlane.f32.xlu0 %v366
  %v368 = vpop.xlane.xlu0 %367
  %v369 = vsel %vm108, %v102, 0.0
  %v370 = vsel %vm108, %v103, 0.0
  %v371 = vadd.f32 %v369, %v370
  %v372 = vsel %vm108, %v104, 0.0
  %v373 = vadd.f32 %v371, %v372
  %v374 = vsel %vm108, %v105, 0.0
  %v375 = vadd.f32 %v373, %v374
  %376 = vadd.xlane.f32.xlu0 %v375
  %v377 = vpop.xlane.xlu0 %376
  %378 = vst [vmem:[%s6] sm:$0xff] %v363
  %379 = vst [vmem:[%s6 + $0x8] sm:$0xff] %v368
  %380 = vst [vmem:[%s6 + $0x10] sm:$0xf] %v377
  %v381 = vmax.f32 %v34, %v38
  %v382 = vsel %vm108, %v42, -inf
  %v383 = vmax.f32 %v381, %v382
  %v384 = vrot.slane %v383, 4
  %v385 = vmax.f32 %v383, %v384
  %v386 = vrot.slane %v385, 2
  %v387 = vmax.f32 %v385, %v386
  %v388 = vrot.slane %v387, 1
  %v389 = vmax.f32 %v387, %v388
  %v390 = vmax.f32 %v35, %v39
  %v391 = vsel %vm108, %v43, -inf
  %v392 = vmax.f32 %v390, %v391
  %v393 = vrot.slane %v392, 4
  %v394 = vmax.f32 %v392, %v393
  %v395 = vrot.slane %v394, 2
  %v396 = vmax.f32 %v394, %v395
  %v397 = vrot.slane %v396, 1
  %v398 = vmax.f32 %v396, %v397
  %v399 = vmax.f32 %v36, %v40
  %v400 = vsel %vm108, %v44, -inf
  %v401 = vmax.f32 %v399, %v400
  %v402 = vrot.slane %v401, 4
  %v403 = vmax.f32 %v401, %v402
  %v404 = vrot.slane %v403, 2
  %v405 = vmax.f32 %v403, %v404
  %v406 = vrot.slane %v405, 1
  %v407 = vmax.f32 %v405, %v406
  %v408 = vmax.f32 %v37, %v41
  %v409 = vsel %vm108, %v45, -inf
  %v410 = vmax.f32 %v408, %v409
  %v411 = vrot.slane %v410, 4
  %v412 = vmax.f32 %v410, %v411
  %v413 = vrot.slane %v412, 2
  %v414 = vmax.f32 %v412, %v413
  %v415 = vrot.slane %v414, 1
  %v416 = vmax.f32 %v414, %v415
  %v417 = vsub.f32 %v34, %v389
  %v418 = vsub.f32 %v35, %v398
  %v419 = vsub.f32 %v36, %v407
  %v420 = vsub.f32 %v37, %v416
  %v421 = vsub.f32 %v38, %v389
  %v422 = vsub.f32 %v39, %v398
  %v423 = vsub.f32 %v40, %v407
  %v424 = vsub.f32 %v41, %v416
  %v425 = vsub.f32 %v42, %v389
  %v426 = vsub.f32 %v43, %v398
  %v427 = vsub.f32 %v44, %v407
  %v428 = vsub.f32 %v45, %v416
  %v429 = vmul.f32 %v417, 1.442695
  %v430 = vpow.pop %v429
  %v431 = vmul.f32 %v418, 1.442695
  %v432 = vpow.pop %v431
  %v433 = vmul.f32 %v419, 1.442695
  %v434 = vpow.pop %v433
  %v435 = vmul.f32 %v420, 1.442695
  %v436 = vpow.pop %v435
  %v437 = vmul.f32 %v421, 1.442695
  %v438 = vpow.pop %v437
  %v439 = vmul.f32 %v422, 1.442695
  %v440 = vpow.pop %v439
  %v441 = vmul.f32 %v423, 1.442695
  %v442 = vpow.pop %v441
  %v443 = vmul.f32 %v424, 1.442695
  %v444 = vpow.pop %v443
  %v445 = vmul.f32 %v425, 1.442695
  %v446 = vpow.pop %v445
  %v447 = vmul.f32 %v426, 1.442695
  %v448 = vpow.pop %v447
  %v449 = vmul.f32 %v427, 1.442695
  %v450 = vpow.pop %v449
  %v451 = vmul.f32 %v428, 1.442695
  %v452 = vpow.pop %v451
  %v453 = vadd.f32 %v430, %v438
  %v454 = vsel %vm108, %v446, 0.0
  %v455 = vadd.f32 %v453, %v454
  %v456 = vrot.slane %v455, 4
  %v457 = vadd.f32 %v455, %v456
  %v458 = vrot.slane %v457, 2
  %v459 = vadd.f32 %v457, %v458
  %v460 = vrot.slane %v459, 1
  %v461 = vadd.f32 %v459, %v460
  %v462 = vadd.f32 %v432, %v440
  %v463 = vsel %vm108, %v448, 0.0
  %v464 = vadd.f32 %v462, %v463
  %v465 = vrot.slane %v464, 4
  %v466 = vadd.f32 %v464, %v465
  %v467 = vrot.slane %v466, 2
  %v468 = vadd.f32 %v466, %v467
  %v469 = vrot.slane %v468, 1
  %v470 = vadd.f32 %v468, %v469
  %v471 = vadd.f32 %v434, %v442
  %v472 = vsel %vm108, %v450, 0.0
  %v473 = vadd.f32 %v471, %v472
  %v474 = vrot.slane %v473, 4
  %v475 = vadd.f32 %v473, %v474
  %v476 = vrot.slane %v475, 2
  %v477 = vadd.f32 %v475, %v476
  %v478 = vrot.slane %v477, 1
  %v479 = vadd.f32 %v477, %v478
  %v480 = vadd.f32 %v436, %v444
  %v481 = vsel %vm108, %v452, 0.0
  %v482 = vadd.f32 %v480, %v481
  %v483 = vrot.slane %v482, 4
  %v484 = vadd.f32 %v482, %v483
  %v485 = vrot.slane %v484, 2
  %v486 = vadd.f32 %v484, %v485
  %v487 = vrot.slane %v486, 1
  %v488 = vadd.f32 %v486, %v487
  %v489 = vlog2.pop %v461
  %v490 = vmul.f32 %v489, 0.6931472
  %v491 = vlog2.pop %v470
  %v492 = vmul.f32 %v491, 0.6931472
  %v493 = vlog2.pop %v479
  %v494 = vmul.f32 %v493, 0.6931472
  %v495 = vlog2.pop %v488
  %v496 = vmul.f32 %v495, 0.6931472
  %v497 = vmul.f32 %v94, %v417
  %v498 = vmul.f32 %v95, %v418
  %v499 = vmul.f32 %v96, %v419
  %v500 = vmul.f32 %v97, %v420
  %v501 = vmul.f32 %v98, %v421
  %v502 = vmul.f32 %v99, %v422
  %v503 = vmul.f32 %v100, %v423
  %v504 = vmul.f32 %v101, %v424
  %v505 = vmul.f32 %v102, %v425
  %v506 = vmul.f32 %v103, %v426
  %v507 = vmul.f32 %v104, %v427
  %v508 = vmul.f32 %v105, %v428
  %v509 = vadd.f32 %v497, %v501
  %v510 = vsel %vm108, %v505, 0.0
  %v511 = vadd.f32 %v509, %v510
  %v512 = vrot.slane %v511, 4
  %v513 = vadd.f32 %v511, %v512
  %v514 = vrot.slane %v513, 2
  %v515 = vadd.f32 %v513, %v514
  %v516 = vrot.slane %v515, 1
  %v517 = vadd.f32 %v515, %v516
  %v518 = vadd.f32 %v498, %v502
  %v519 = vsel %vm108, %v506, 0.0
  %v520 = vadd.f32 %v518, %v519
  %v521 = vrot.slane %v520, 4
  %v522 = vadd.f32 %v520, %v521
  %v523 = vrot.slane %v522, 2
  %v524 = vadd.f32 %v522, %v523
  %v525 = vrot.slane %v524, 1
  %v526 = vadd.f32 %v524, %v525
  %v527 = vadd.f32 %v499, %v503
  %v528 = vsel %vm108, %v507, 0.0
  %v529 = vadd.f32 %v527, %v528
  %v530 = vrot.slane %v529, 4
  %v531 = vadd.f32 %v529, %v530
  %v532 = vrot.slane %v531, 2
  %v533 = vadd.f32 %v531, %v532
  %v534 = vrot.slane %v533, 1
  %v535 = vadd.f32 %v533, %v534
  %v536 = vadd.f32 %v500, %v504
  %v537 = vsel %vm108, %v508, 0.0
  %v538 = vadd.f32 %v536, %v537
  %v539 = vrot.slane %v538, 4
  %v540 = vadd.f32 %v538, %v539
  %v541 = vrot.slane %v540, 2
  %v542 = vadd.f32 %v540, %v541
  %v543 = vrot.slane %v542, 1
  %v544 = vadd.f32 %v542, %v543
  %v545 = vsub.f32 %v517, %v490
  %v546 = vsub.f32 %v526, %v492
  %v547 = vsub.f32 %v535, %v494
  %v548 = vsub.f32 %v544, %v496
  %550 = vset.pattern.permute.xlu0 0
  %551 = vperm.xlu0 %550, %v47
  %v552 = vpop.permute.xlu0 %551
  %555 = vset.pattern.permute.xlu0 0
  %556 = vperm.xlu0 %555, %v48
  %v557 = vpop.permute.xlu0 %556
  %560 = vset.pattern.permute.xlu0 0
  %561 = vperm.xlu0 %560, %v49
  %v562 = vpop.permute.xlu0 %561
  %v564 = vmul.f32 %v94, %v552
  %v565 = vmul.f32 %v95, %v552
  %v566 = vmul.f32 %v96, %v552
  %v567 = vmul.f32 %v97, %v552
  %v568 = vmul.f32 %v98, %v557
  %v569 = vmul.f32 %v99, %v557
  %v570 = vmul.f32 %v100, %v557
  %v571 = vmul.f32 %v101, %v557
  %v572 = vmul.f32 %v102, %v562
  %v573 = vmul.f32 %v103, %v562
  %v574 = vmul.f32 %v104, %v562
  %v575 = vmul.f32 %v105, %v562
  %v576 = vadd.f32 %v564, %v568
  %v577 = vsel %vm108, %v572, 0.0
  %v578 = vadd.f32 %v576, %v577
  %v579 = vrot.slane %v578, 4
  %v580 = vadd.f32 %v578, %v579
  %v581 = vrot.slane %v580, 2
  %v582 = vadd.f32 %v580, %v581
  %v583 = vrot.slane %v582, 1
  %v584 = vadd.f32 %v582, %v583
  %v585 = vadd.f32 %v565, %v569
  %v586 = vsel %vm108, %v573, 0.0
  %v587 = vadd.f32 %v585, %v586
  %v588 = vrot.slane %v587, 4
  %v589 = vadd.f32 %v587, %v588
  %v590 = vrot.slane %v589, 2
  %v591 = vadd.f32 %v589, %v590
  %v592 = vrot.slane %v591, 1
  %v593 = vadd.f32 %v591, %v592
  %v594 = vadd.f32 %v566, %v570
  %v595 = vsel %vm108, %v574, 0.0
  %v596 = vadd.f32 %v594, %v595
  %v597 = vrot.slane %v596, 4
  %v598 = vadd.f32 %v596, %v597
  %v599 = vrot.slane %v598, 2
  %v600 = vadd.f32 %v598, %v599
  %v601 = vrot.slane %v600, 1
  %v602 = vadd.f32 %v600, %v601
  %v603 = vadd.f32 %v567, %v571
  %v604 = vsel %vm108, %v575, 0.0
  %v605 = vadd.f32 %v603, %v604
  %v606 = vrot.slane %v605, 4
  %v607 = vadd.f32 %v605, %v606
  %v608 = vrot.slane %v607, 2
  %v609 = vadd.f32 %v607, %v608
  %v610 = vrot.slane %v609, 1
  %v611 = vadd.f32 %v609, %v610
  %v612 = vsub.f32 0.0, %v584
  %v613 = vsub.f32 0.0, %v593
  %v614 = vsub.f32 0.0, %v602
  %v615 = vsub.f32 0.0, %v611
  %v616 = vmul.f32 %v612, %v545
  %v617 = vmul.f32 %v613, %v546
  %v618 = vmul.f32 %v614, %v547
  %v619 = vmul.f32 %v615, %v548
  %v624 = vcombine.low %v616, %v617
  %v625 = vcombine.low %v618, %v619
  %v627 = vunpack.c.l.s4 1966171168
  %v628 = vunpack.c.0.s8 %v627
  %v629 = vlaneseq
  %v630 = vshrl.u32 %v629, 7
  %v631 = vsub.s32 %v628, %v630
  %v632 = vrot.slane %v624, %v631
  %v634 = vunpack.c.l.s4 1966171168
  %v635 = vunpack.c.0.s8 %v634
  %v636 = vlaneseq
  %v637 = vshrl.u32 %v636, 7
  %v638 = vsub.s32 %v635, %v637
  %v639 = vrot.slane %v625, %v638
  %v640 = vcombine.low %v632, %v639
  %v642 = vunpack.c.l.s4 1966171168
  %v643 = vunpack.c.0.s8 %v642
  %v644 = vlaneseq
  %v645 = vshrl.u32 %v644, 7
  %v646 = vsub.s32 %v643, %v645
  %v647 = vrot.slane %v640, %v646
  %v649 = vlaneseq
  %vm650 = vcmp.ge.s32.totalorder %v649, 0
  %vm651 = vcmp.lt.s32.totalorder %v649, 512
  %vm652 = vmand %vm650, %vm651
  %653 = vst.msk [vmem:[%s7] sm:$0xf] %vm652, %v647
  %v658 = vcombine.low %v584, %v593
  %v659 = vcombine.low %v602, %v611
  %v661 = vunpack.c.l.s4 1966171168
  %v662 = vunpack.c.0.s8 %v661
  %v663 = vlaneseq
  %v664 = vshrl.u32 %v663, 7
  %v665 = vsub.s32 %v662, %v664
  %v666 = vrot.slane %v658, %v665
  %v668 = vunpack.c.l.s4 1966171168
  %v669 = vunpack.c.0.s8 %v668
  %v670 = vlaneseq
  %v671 = vshrl.u32 %v670, 7
  %v672 = vsub.s32 %v669, %v671
  %v673 = vrot.slane %v659, %v672
  %v674 = vcombine.low %v666, %v673
  %v676 = vunpack.c.l.s4 1966171168
  %v677 = vunpack.c.0.s8 %v676
  %v678 = vlaneseq
  %v679 = vshrl.u32 %v678, 7
  %v680 = vsub.s32 %v677, %v679
  %v681 = vrot.slane %v674, %v680
  %683 = vst.msk [vmem:[%s8] sm:$0xf] %vm652, %v681
  // Predicated region
  $region18: #{lovasz_softmax_loss.2} parent=0 // pred_check
    _
  $region19: #{lovasz_softmax_loss.2} parent=0 // pred_check_branch
    %685 = sbr.rel (0) target = $region21
  $region20: #{lovasz_softmax_loss.2} parent=0 // pred_region
    _
  $region21: #{lovasz_softmax_loss.2} parent=0 // pred_fallthru
    _
  // Predicated region
  $region22: #{lovasz_softmax_loss.2} parent=0 // pred_check
    _
  $region23: #{lovasz_softmax_loss.2} parent=0 // pred_check_branch
    %687 = sbr.rel (0) target = $region25
  $region24: #{lovasz_softmax_loss.2} parent=0 // pred_region
    _
  $region25: #{lovasz_softmax_loss.2} parent=0 // pred_fallthru
    _
  // Predicated region
  $region26: #{lovasz_softmax_loss.2} parent=0 // pred_check
    _
  $region27: #{lovasz_softmax_loss.2} parent=0 // pred_check_branch
    %689 = sbr.rel (0) target = $region29
  $region28: #{lovasz_softmax_loss.2} parent=0 // pred_region
    _
  $region29: #{lovasz_softmax_loss.2} parent=0 // pred_fallthru
    _
  // Predicated region
  $region30: #{lovasz_softmax_loss.2} parent=0 // pred_check
    _
  $region31: #{lovasz_softmax_loss.2} parent=0 // pred_check_branch
    %691 = sbr.rel (0) target = $region33
  $region32: #{lovasz_softmax_loss.2} parent=0 // pred_region
    _
  $region33: #{lovasz_softmax_loss.2} parent=0 // pred_fallthru
    _
  // Predicated region
  $region34: #{lovasz_softmax_loss.2} parent=0 // pred_check
    _
  $region35: #{lovasz_softmax_loss.2} parent=0 // pred_check_branch
    %693 = sbr.rel (0) target = $region37
  $region36: #{lovasz_softmax_loss.2} parent=0 // pred_region
    _
  $region37: #{lovasz_softmax_loss.2} parent=0 // pred_fallthru
    _
  // Predicated region
  $region38: #{lovasz_softmax_loss.2} parent=0 // pred_check
    _
  $region39: #{lovasz_softmax_loss.2} parent=0 // pred_check_branch
    %695 = sbr.rel (0) target = $region41
  $region40: #{lovasz_softmax_loss.2} parent=0 // pred_region
    _
  $region41: #{lovasz_softmax_loss.2} parent=0 // pred_fallthru
    _
  // Predicated region
  $region42: #{lovasz_softmax_loss.2} parent=0 // pred_check
    _
  $region43: #{lovasz_softmax_loss.2} parent=0 // pred_check_branch
    %697 = sbr.rel (0) target = $region45
  $region44: #{lovasz_softmax_loss.2} parent=0 // pred_region
    _
  $region45: #{lovasz_softmax_loss.2} parent=0 // pred_fallthru
    _
  // Predicated region
  $region46: #{lovasz_softmax_loss.2} parent=0 // pred_check
    _
  $region47: #{lovasz_softmax_loss.2} parent=0 // pred_check_branch
    %699 = sbr.rel (0) target = $region49
  $region48: #{lovasz_softmax_loss.2} parent=0 // pred_region
    _
  $region49: #{lovasz_softmax_loss.2} parent=0 // pred_fallthru
    _
  // Predicated region
  $region50: #{lovasz_softmax_loss.2} parent=0 // pred_check
    _
  $region51: #{lovasz_softmax_loss.2} parent=0 // pred_check_branch
    %701 = sbr.rel (0) target = $region53
  $region52: #{lovasz_softmax_loss.2} parent=0 // pred_region
    _
  $region53: #{lovasz_softmax_loss.2} parent=0 // pred_fallthru
    _
  // Predicated region
  $region54: #{lovasz_softmax_loss.2} parent=0 // pred_check
    _
  $region55: #{lovasz_softmax_loss.2} parent=0 // pred_check_branch
    %703 = sbr.rel (0) target = $region57
  $region56: #{lovasz_softmax_loss.2} parent=0 // pred_region
    _
  $region57: #{lovasz_softmax_loss.2} parent=0 // pred_fallthru
    _

// kernel: lovasz_softmax_loss.3
$region0: #{lovasz_softmax_loss.3}
  #allocation0 [shape = 'u32[]', space=smem, size = 0x4, offset = 0x4, fixed_abs, tag = 'smem constant byte address 0x4 - core index']
  #allocation1 [shape = 'u32[144,128]{1,0:T(1,128)}', space=vmem, size = 0x12000, scoped, tag = 'internal scratch']
  #allocation2 [shape = 'f32[20,128]{1,0:T(8,128)}', space=vmem, size = 0x3000, scoped, tag = 'scratch operand']
  #allocation3 [shape = 'f32[20,128]{1,0:T(8,128)}', space=vmem, size = 0x3000, scoped, tag = 'scratch operand']
  #allocation4 [shape = 'bf16[256,256]{1,0:T(16,128)(2,1)}', space=vmem, size = 0x20000, scoped, tag = 'scratch operand']
  %s0 = inlined_call_operand.vmem [shape: f32[20,512], index: 0, kind: input, shape index: {}]
  %s1 = inlined_call_operand.vmem [shape: bf16[20,512], index: 1, kind: input, shape index: {}]
  %s2 = inlined_call_operand.vmem [shape: f32[20,1], index: 2, kind: input, shape index: {}]
  %s3 = inlined_call_operand.hbm [shape: f32[1,1], index: 3, kind: output, shape index: {}]
  %s4 = sld [smem:[#allocation0]]
  $region37: #{lovasz_softmax_loss.3} parent=0
    _
  %s6 = ssub.s32 1, %s4
  %s7 = scalar_select 0, %s6, %s4
  $region1: #{lovasz_softmax_loss.3} parent=0
    #allocation5 [shape = 'u8[512]{0}', space=vmem, size = 0x400, scoped, tag = 'output window, operand 0, single buffered']
    #allocation6 [shape = 's32[1]{0}', space=sflag, size = 0x4, scoped, tag = 'scoped memory for lovasz_softmax_loss.3']
    %8 = vsyncpa [#allocation6], 0
    // Predicated region
    $region2: #{lovasz_softmax_loss.3} parent=1 // pred_check
      _
    $region3: #{lovasz_softmax_loss.3} parent=1 // pred_check_branch
      %10 = sbr.rel (0) target = $region5
    $region4: #{lovasz_softmax_loss.3} parent=1 // pred_region
      _
    $region5: #{lovasz_softmax_loss.3} parent=1 // pred_fallthru
      _
    // Predicated region
    $region6: #{lovasz_softmax_loss.3} parent=1 // pred_check
      _
    $region7: #{lovasz_softmax_loss.3} parent=1 // pred_check_branch
      %12 = sbr.rel (0) target = $region9
    $region8: #{lovasz_softmax_loss.3} parent=1 // pred_region
      _
    $region9: #{lovasz_softmax_loss.3} parent=1 // pred_fallthru
      _
    // Predicated region
    $region10: #{lovasz_softmax_loss.3} parent=1 // pred_check
      _
    $region11: #{lovasz_softmax_loss.3} parent=1 // pred_check_branch
      %14 = sbr.rel (0) target = $region13
    $region12: #{lovasz_softmax_loss.3} parent=1 // pred_region
      _
    $region13: #{lovasz_softmax_loss.3} parent=1 // pred_fallthru
      _
    %p15 = scmp.eq.s32.totalorder 0, 0
    // Predicated region
    $region14: #{lovasz_softmax_loss.3} parent=1 // pred_check
      %p16 = pneg %p15
    $region15: #{lovasz_softmax_loss.3} parent=1 // pred_check_branch
      %18 = sbr.rel (%p16) target = $region17
    $region16: #{lovasz_softmax_loss.3} parent=1 // pred_region
      %19 = vst [vmem:[#allocation2] sm:$0xff] 0.0
      %20 = vst [vmem:[#allocation2 + $0x8] sm:$0xff] 0.0
      %21 = vst [vmem:[#allocation2 + $0x10] sm:$0xf] 0.0
      %22 = vst [vmem:[#allocation3] sm:$0xff] 0.0
      %23 = vst [vmem:[#allocation3 + $0x8] sm:$0xff] 0.0
      %24 = vst [vmem:[#allocation3 + $0x10] sm:$0xf] 0.0
      %v25 = vlaneseq
      %v26 = vshrl.u32 %v25, 7
      %v27 = vadd.s32 %v26, 8
      %v28 = vadd.s32 %v26, 16
      %v29 = vadd.s32 %v26, 24
      %v30 = vadd.s32 %v26, 32
      %v31 = vadd.s32 %v26, 40
      %v32 = vadd.s32 %v26, 48
      %v33 = vadd.s32 %v26, 56
      %v34 = vadd.s32 %v26, 64
      %v35 = vadd.s32 %v26, 72
      %v36 = vadd.s32 %v26, 80
      %v37 = vadd.s32 %v26, 88
      %v38 = vadd.s32 %v26, 96
      %v39 = vadd.s32 %v26, 104
      %v40 = vadd.s32 %v26, 112
      %v41 = vadd.s32 %v26, 120
      %v42 = vadd.s32 %v26, 128
      %v43 = vadd.s32 %v26, 136
      %v44 = vadd.s32 %v26, 144
      %v45 = vadd.s32 %v26, 152
      %v46 = vadd.s32 %v26, 160
      %v47 = vadd.s32 %v26, 168
      %v48 = vadd.s32 %v26, 176
      %v49 = vadd.s32 %v26, 184
      %v50 = vadd.s32 %v26, 192
      %v51 = vadd.s32 %v26, 200
      %v52 = vadd.s32 %v26, 208
      %v53 = vadd.s32 %v26, 216
      %v54 = vadd.s32 %v26, 224
      %v55 = vadd.s32 %v26, 232
      %v56 = vadd.s32 %v26, 240
      %v57 = vadd.s32 %v26, 248
      %v58 = vlaneseq
      %v59 = vand.u32 %v58, 127
      %v60 = vadd.s32 %v59, 128
      %vm61 = vcmp.le.s32.totalorder %v26, %v59
      %vm62 = vcmp.le.s32.totalorder %v26, %v60
      %vm63 = vcmp.le.s32.totalorder %v27, %v59
      %vm64 = vcmp.le.s32.totalorder %v27, %v60
      %vm65 = vcmp.le.s32.totalorder %v28, %v59
      %vm66 = vcmp.le.s32.totalorder %v28, %v60
      %vm67 = vcmp.le.s32.totalorder %v29, %v59
      %vm68 = vcmp.le.s32.totalorder %v29, %v60
      %vm69 = vcmp.le.s32.totalorder %v30, %v59
      %vm70 = vcmp.le.s32.totalorder %v30, %v60
      %vm71 = vcmp.le.s32.totalorder %v31, %v59
      %vm72 = vcmp.le.s32.totalorder %v31, %v60
      %vm73 = vcmp.le.s32.totalorder %v32, %v59
      %vm74 = vcmp.le.s32.totalorder %v32, %v60
      %vm75 = vcmp.le.s32.totalorder %v33, %v59
      %vm76 = vcmp.le.s32.totalorder %v33, %v60
      %vm77 = vcmp.le.s32.totalorder %v34, %v59
      %vm78 = vcmp.le.s32.totalorder %v34, %v60
      %vm79 = vcmp.le.s32.totalorder %v35, %v59
      %vm80 = vcmp.le.s32.totalorder %v35, %v60
      %vm81 = vcmp.le.s32.totalorder %v36, %v59
      %vm82 = vcmp.le.s32.totalorder %v36, %v60
      %vm83 = vcmp.le.s32.totalorder %v37, %v59
      %vm84 = vcmp.le.s32.totalorder %v37, %v60
      %vm85 = vcmp.le.s32.totalorder %v38, %v59
      %vm86 = vcmp.le.s32.totalorder %v38, %v60
      %vm87 = vcmp.le.s32.totalorder %v39, %v59
      %vm88 = vcmp.le.s32.totalorder %v39, %v60
      %vm89 = vcmp.le.s32.totalorder %v40, %v59
      %vm90 = vcmp.le.s32.totalorder %v40, %v60
      %vm91 = vcmp.le.s32.totalorder %v41, %v59
      %vm92 = vcmp.le.s32.totalorder %v41, %v60
      %vm93 = vcmp.le.s32.totalorder %v42, %v59
      %vm94 = vcmp.le.s32.totalorder %v42, %v60
      %vm95 = vcmp.le.s32.totalorder %v43, %v59
      %vm96 = vcmp.le.s32.totalorder %v43, %v60
      %vm97 = vcmp.le.s32.totalorder %v44, %v59
      %vm98 = vcmp.le.s32.totalorder %v44, %v60
      %vm99 = vcmp.le.s32.totalorder %v45, %v59
      %vm100 = vcmp.le.s32.totalorder %v45, %v60
      %vm101 = vcmp.le.s32.totalorder %v46, %v59
      %vm102 = vcmp.le.s32.totalorder %v46, %v60
      %vm103 = vcmp.le.s32.totalorder %v47, %v59
      %vm104 = vcmp.le.s32.totalorder %v47, %v60
      %vm105 = vcmp.le.s32.totalorder %v48, %v59
      %vm106 = vcmp.le.s32.totalorder %v48, %v60
      %vm107 = vcmp.le.s32.totalorder %v49, %v59
      %vm108 = vcmp.le.s32.totalorder %v49, %v60
      %vm109 = vcmp.le.s32.totalorder %v50, %v59
      %vm110 = vcmp.le.s32.totalorder %v50, %v60
      %vm111 = vcmp.le.s32.totalorder %v51, %v59
      %vm112 = vcmp.le.s32.totalorder %v51, %v60
      %vm113 = vcmp.le.s32.totalorder %v52, %v59
      %vm114 = vcmp.le.s32.totalorder %v52, %v60
      %vm115 = vcmp.le.s32.totalorder %v53, %v59
      %vm116 = vcmp.le.s32.totalorder %v53, %v60
      %vm117 = vcmp.le.s32.totalorder %v54, %v59
      %vm118 = vcmp.le.s32.totalorder %v54, %v60
      %vm119 = vcmp.le.s32.totalorder %v55, %v59
      %vm120 = vcmp.le.s32.totalorder %v55, %v60
      %vm121 = vcmp.le.s32.totalorder %v56, %v59
      %vm122 = vcmp.le.s32.totalorder %v56, %v60
      %vm123 = vcmp.le.s32.totalorder %v57, %v59
      %vm124 = vcmp.le.s32.totalorder %v57, %v60
      %v125 = vsel %vm61, 1, 0
      %v126 = vsel %vm62, 1, 0
      %v127 = vsel %vm63, 1, 0
      %v128 = vsel %vm64, 1, 0
      %v129 = vsel %vm65, 1, 0
      %v130 = vsel %vm66, 1, 0
      %v131 = vsel %vm67, 1, 0
      %v132 = vsel %vm68, 1, 0
      %v133 = vsel %vm69, 1, 0
      %v134 = vsel %vm70, 1, 0
      %v135 = vsel %vm71, 1, 0
      %v136 = vsel %vm72, 1, 0
      %v137 = vsel %vm73, 1, 0
      %v138 = vsel %vm74, 1, 0
      %v139 = vsel %vm75, 1, 0
      %v140 = vsel %vm76, 1, 0
      %v141 = vsel %vm77, 1, 0
      %v142 = vsel %vm78, 1, 0
      %v143 = vsel %vm79, 1, 0
      %v144 = vsel %vm80, 1, 0
      %v145 = vsel %vm81, 1, 0
      %v146 = vsel %vm82, 1, 0
      %v147 = vsel %vm83, 1, 0
      %v148 = vsel %vm84, 1, 0
      %v149 = vsel %vm85, 1, 0
      %v150 = vsel %vm86, 1, 0
      %v151 = vsel %vm87, 1, 0
      %v152 = vsel %vm88, 1, 0
      %v153 = vsel %vm89, 1, 0
      %v154 = vsel %vm90, 1, 0
      %v155 = vsel %vm91, 1, 0
      %v156 = vsel %vm92, 1, 0
      %v157 = vsel %vm93, 1, 0
      %v158 = vsel %vm94, 1, 0
      %v159 = vsel %vm95, 1, 0
      %v160 = vsel %vm96, 1, 0
      %v161 = vsel %vm97, 1, 0
      %v162 = vsel %vm98, 1, 0
      %v163 = vsel %vm99, 1, 0
      %v164 = vsel %vm100, 1, 0
      %v165 = vsel %vm101, 1, 0
      %v166 = vsel %vm102, 1, 0
      %v167 = vsel %vm103, 1, 0
      %v168 = vsel %vm104, 1, 0
      %v169 = vsel %vm105, 1, 0
      %v170 = vsel %vm106, 1, 0
      %v171 = vsel %vm107, 1, 0
      %v172 = vsel %vm108, 1, 0
      %v173 = vsel %vm109, 1, 0
      %v174 = vsel %vm110, 1, 0
      %v175 = vsel %vm111, 1, 0
      %v176 = vsel %vm112, 1, 0
      %v177 = vsel %vm113, 1, 0
      %v178 = vsel %vm114, 1, 0
      %v179 = vsel %vm115, 1, 0
      %v180 = vsel %vm116, 1, 0
      %v181 = vsel %vm117, 1, 0
      %v182 = vsel %vm118, 1, 0
      %v183 = vsel %vm119, 1, 0
      %v184 = vsel %vm120, 1, 0
      %v185 = vsel %vm121, 1, 0
      %v186 = vsel %vm122, 1, 0
      %v187 = vsel %vm123, 1, 0
      %v188 = vsel %vm124, 1, 0
      %v189 = vcvt.s32.f32 %v125
      %v190 = vcvt.s32.f32 %v126
      %v191 = vcvt.s32.f32 %v127
      %v192 = vcvt.s32.f32 %v128
      %v193 = vcvt.s32.f32 %v129
      %v194 = vcvt.s32.f32 %v130
      %v195 = vcvt.s32.f32 %v131
      %v196 = vcvt.s32.f32 %v132
      %v197 = vcvt.s32.f32 %v133
      %v198 = vcvt.s32.f32 %v134
      %v199 = vcvt.s32.f32 %v135
      %v200 = vcvt.s32.f32 %v136
      %v201 = vcvt.s32.f32 %v137
      %v202 = vcvt.s32.f32 %v138
      %v203 = vcvt.s32.f32 %v139
      %v204 = vcvt.s32.f32 %v140
      %v205 = vcvt.s32.f32 %v141
      %v206 = vcvt.s32.f32 %v142
      %v207 = vcvt.s32.f32 %v143
      %v208 = vcvt.s32.f32 %v144
      %v209 = vcvt.s32.f32 %v145
      %v210 = vcvt.s32.f32 %v146
      %v211 = vcvt.s32.f32 %v147
      %v212 = vcvt.s32.f32 %v148
      %v213 = vcvt.s32.f32 %v149
      %v214 = vcvt.s32.f32 %v150
      %v215 = vcvt.s32.f32 %v151
      %v216 = vcvt.s32.f32 %v152
      %v217 = vcvt.s32.f32 %v153
      %v218 = vcvt.s32.f32 %v154
      %v219 = vcvt.s32.f32 %v155
      %v220 = vcvt.s32.f32 %v156
      %v221 = vcvt.s32.f32 %v157
      %v222 = vcvt.s32.f32 %v158
      %v223 = vcvt.s32.f32 %v159
      %v224 = vcvt.s32.f32 %v160
      %v225 = vcvt.s32.f32 %v161
      %v226 = vcvt.s32.f32 %v162
      %v227 = vcvt.s32.f32 %v163
      %v228 = vcvt.s32.f32 %v164
      %v229 = vcvt.s32.f32 %v165
      %v230 = vcvt.s32.f32 %v166
      %v231 = vcvt.s32.f32 %v167
      %v232 = vcvt.s32.f32 %v168
      %v233 = vcvt.s32.f32 %v169
      %v234 = vcvt.s32.f32 %v170
      %v235 = vcvt.s32.f32 %v171
      %v236 = vcvt.s32.f32 %v172
      %v237 = vcvt.s32.f32 %v173
      %v238 = vcvt.s32.f32 %v174
      %v239 = vcvt.s32.f32 %v175
      %v240 = vcvt.s32.f32 %v176
      %v241 = vcvt.s32.f32 %v177
      %v242 = vcvt.s32.f32 %v178
      %v243 = vcvt.s32.f32 %v179
      %v244 = vcvt.s32.f32 %v180
      %v245 = vcvt.s32.f32 %v181
      %v246 = vcvt.s32.f32 %v182
      %v247 = vcvt.s32.f32 %v183
      %v248 = vcvt.s32.f32 %v184
      %v249 = vcvt.s32.f32 %v185
      %v250 = vcvt.s32.f32 %v186
      %v251 = vcvt.s32.f32 %v187
      %v252 = vcvt.s32.f32 %v188
      %v253 = vpack.c.bf16 %v191, %v189
      %v254 = vpack.c.bf16 %v192, %v190
      %v255 = vpack.c.bf16 %v195, %v193
      %v256 = vpack.c.bf16 %v196, %v194
      %v257 = vpack.c.bf16 %v199, %v197
      %v258 = vpack.c.bf16 %v200, %v198
      %v259 = vpack.c.bf16 %v203, %v201
      %v260 = vpack.c.bf16 %v204, %v202
      %v261 = vpack.c.bf16 %v207, %v205
      %v262 = vpack.c.bf16 %v208, %v206
      %v263 = vpack.c.bf16 %v211, %v209
      %v264 = vpack.c.bf16 %v212, %v210
      %v265 = vpack.c.bf16 %v215, %v213
      %v266 = vpack.c.bf16 %v216, %v214
      %v267 = vpack.c.bf16 %v219, %v217
      %v268 = vpack.c.bf16 %v220, %v218
      %v269 = vpack.c.bf16 %v223, %v221
      %v270 = vpack.c.bf16 %v224, %v222
      %v271 = vpack.c.bf16 %v227, %v225
      %v272 = vpack.c.bf16 %v228, %v226
      %v273 = vpack.c.bf16 %v231, %v229
      %v274 = vpack.c.bf16 %v232, %v230
      %v275 = vpack.c.bf16 %v235, %v233
      %v276 = vpack.c.bf16 %v236, %v234
      %v277 = vpack.c.bf16 %v239, %v237
      %v278 = vpack.c.bf16 %v240, %v238
      %v279 = vpack.c.bf16 %v243, %v241
      %v280 = vpack.c.bf16 %v244, %v242
      %v281 = vpack.c.bf16 %v247, %v245
      %v282 = vpack.c.bf16 %v248, %v246
      %v283 = vpack.c.bf16 %v251, %v249
      %v284 = vpack.c.bf16 %v252, %v250
      %285 = vst [vmem:[#allocation4] sm:$0xff] %v253
      %286 = vst [vmem:[#allocation4 + $0x8] sm:$0xff] %v254
      %287 = vst [vmem:[#allocation4 + $0x10] sm:$0xff] %v255
      %288 = vst [vmem:[#allocation4 + $0x18] sm:$0xff] %v256
      %289 = vst [vmem:[#allocation4 + $0x20] sm:$0xff] %v257
      %290 = vst [vmem:[#allocation4 + $0x28] sm:$0xff] %v258
      %291 = vst [vmem:[#allocation4 + $0x30] sm:$0xff] %v259
      %292 = vst [vmem:[#allocation4 + $0x38] sm:$0xff] %v260
      %293 = vst [vmem:[#allocation4 + $0x40] sm:$0xff] %v261
      %294 = vst [vmem:[#allocation4 + $0x48] sm:$0xff] %v262
      %295 = vst [vmem:[#allocation4 + $0x50] sm:$0xff] %v263
      %296 = vst [vmem:[#allocation4 + $0x58] sm:$0xff] %v264
      %297 = vst [vmem:[#allocation4 + $0x60] sm:$0xff] %v265
      %298 = vst [vmem:[#allocation4 + $0x68] sm:$0xff] %v266
      %299 = vst [vmem:[#allocation4 + $0x70] sm:$0xff] %v267
      %300 = vst [vmem:[#allocation4 + $0x78] sm:$0xff] %v268
      %301 = vst [vmem:[#allocation4 + $0x80] sm:$0xff] %v269
      %302 = vst [vmem:[#allocation4 + $0x88] sm:$0xff] %v270
      %303 = vst [vmem:[#allocation4 + $0x90] sm:$0xff] %v271
      %304 = vst [vmem:[#allocation4 + $0x98] sm:$0xff] %v272
      %305 = vst [vmem:[#allocation4 + $0xa0] sm:$0xff] %v273
      %306 = vst [vmem:[#allocation4 + $0xa8] sm:$0xff] %v274
      %307 = vst [vmem:[#allocation4 + $0xb0] sm:$0xff] %v275
      %308 = vst [vmem:[#allocation4 + $0xb8] sm:$0xff] %v276
      %309 = vst [vmem:[#allocation4 + $0xc0] sm:$0xff] %v277
      %310 = vst [vmem:[#allocation4 + $0xc8] sm:$0xff] %v278
      %311 = vst [vmem:[#allocation4 + $0xd0] sm:$0xff] %v279
      %312 = vst [vmem:[#allocation4 + $0xd8] sm:$0xff] %v280
      %313 = vst [vmem:[#allocation4 + $0xe0] sm:$0xff] %v281
      %314 = vst [vmem:[#allocation4 + $0xe8] sm:$0xff] %v282
      %315 = vst [vmem:[#allocation4 + $0xf0] sm:$0xff] %v283
      %316 = vst [vmem:[#allocation4 + $0xf8] sm:$0xff] %v284
    $region17: #{lovasz_softmax_loss.3} parent=1 // pred_fallthru
      _
    %v317 = vld [vmem:[%s2] sm:$0xff]
    %v318 = vld [vmem:[%s2 + $0x8] sm:$0xff]
    %v319 = vld [vmem:[%s2 + $0x10] sm:$0xf]
    %v320 = vld [vmem:[#allocation4] sm:$0xff]
    %v321 = vld [vmem:[#allocation4 + $0x8] sm:$0xff]
    %v322 = vld [vmem:[#allocation4 + $0x10] sm:$0xff]
    %v323 = vld [vmem:[#allocation4 + $0x18] sm:$0xff]
    %v324 = vld [vmem:[#allocation4 + $0x20] sm:$0xff]
    %v325 = vld [vmem:[#allocation4 + $0x28] sm:$0xff]
    %v326 = vld [vmem:[#allocation4 + $0x30] sm:$0xff]
    %v327 = vld [vmem:[#allocation4 + $0x38] sm:$0xff]
    %v328 = vld [vmem:[#allocation4 + $0x40] sm:$0xff]
    %v329 = vld [vmem:[#allocation4 + $0x48] sm:$0xff]
    %v330 = vld [vmem:[#allocation4 + $0x50] sm:$0xff]
    %v331 = vld [vmem:[#allocation4 + $0x58] sm:$0xff]
    %v332 = vld [vmem:[#allocation4 + $0x60] sm:$0xff]
    %v333 = vld [vmem:[#allocation4 + $0x68] sm:$0xff]
    %v334 = vld [vmem:[#allocation4 + $0x70] sm:$0xff]
    %v335 = vld [vmem:[#allocation4 + $0x78] sm:$0xff]
    %v336 = vld [vmem:[#allocation4 + $0x80] sm:$0xff]
    %v337 = vld [vmem:[#allocation4 + $0x88] sm:$0xff]
    %v338 = vld [vmem:[#allocation4 + $0x90] sm:$0xff]
    %v339 = vld [vmem:[#allocation4 + $0x98] sm:$0xff]
    %v340 = vld [vmem:[#allocation4 + $0xa0] sm:$0xff]
    %v341 = vld [vmem:[#allocation4 + $0xa8] sm:$0xff]
    %v342 = vld [vmem:[#allocation4 + $0xb0] sm:$0xff]
    %v343 = vld [vmem:[#allocation4 + $0xb8] sm:$0xff]
    %v344 = vld [vmem:[#allocation4 + $0xc0] sm:$0xff]
    %v345 = vld [vmem:[#allocation4 + $0xc8] sm:$0xff]
    %v346 = vld [vmem:[#allocation4 + $0xd0] sm:$0xff]
    %v347 = vld [vmem:[#allocation4 + $0xd8] sm:$0xff]
    %v348 = vld [vmem:[#allocation4 + $0xe0] sm:$0xff]
    %v349 = vld [vmem:[#allocation4 + $0xe8] sm:$0xff]
    %v350 = vld [vmem:[#allocation4 + $0xf0] sm:$0xff]
    %v351 = vld [vmem:[#allocation4 + $0xf8] sm:$0xff]
    %v352 = vlaneseq
    %v353 = vand.u32 %v352, 127
    %v354 = vadd.s32 %v353, 128
    %vm355 = vcmp.eq.f32.partialorder %v317, 0.0
    %vm356 = vcmp.eq.f32.partialorder %v318, 0.0
    %vm357 = vcmp.eq.f32.partialorder %v319, 0.0
    %v358 = vld [vmem:[#allocation2] sm:$0xff]
    %v359 = vld [vmem:[#allocation2 + $0x8] sm:$0xff]
    %v360 = vld [vmem:[#allocation2 + $0x10] sm:$0xf]
    loop: start=0, step=1, limit=2
    $region18: #{lovasz_softmax_loss.3} parent=1 // loop_pre_header
      _
    $region19: #{lovasz_softmax_loss.3} parent=1 // loop_header
      %s362 = sphi 0, %s366
      %p363 = scmp.ge.s32.totalorder %s362, 2
      %v367 = vphi %v358, %v626
      %v368 = vphi %v359, %v628
      %v369 = vphi %v360, %v630
      %v370 = vphi 0.0, %v619
      %v371 = vphi 0.0, %v620
      %v372 = vphi 0.0, %v621
    $region20: #{lovasz_softmax_loss.3} parent=1 // loop_header_branch
      %365 = sbr.rel (%p363) target = $region24
    $region21: #{lovasz_softmax_loss.3} parent=1 // loop_body
      %s373 = smul.u32 %s362, 256
      %s374 = sshra.s32 %s373, 7
      %s375 = sand.u32 %s373, 127
      %s376 = smul.addr %s374, 4
      %s377 = scalar_lea.vmem %s1, %s376
      %v378 = vld [vmem:[%s377] sm:$0xff]
      %v379 = vld [vmem:[%s377 + $0x10] sm:$0xff]
      %v380 = vld [vmem:[%s377 + $0x20] sm:$0x33]
      %s381 = smul.addr %s374, 8
      %s382 = scalar_lea.vmem %s0, %s381
      %v383 = vld [vmem:[%s382] sm:$0xff]
      %v384 = vld [vmem:[%s382 + $0x8] sm:$0xff]
      %v385 = vld [vmem:[%s382 + $0x20] sm:$0xff]
      %v386 = vld [vmem:[%s382 + $0x28] sm:$0xff]
      %v387 = vld [vmem:[%s382 + $0x40] sm:$0xf]
      %v388 = vld [vmem:[%s382 + $0x48] sm:$0xf]
      %v389 = vunpack.c.l.bf16 %v378
      %v390 = vunpack.c.h.bf16 %v378
      %v391 = vunpack.c.l.bf16 %v379
      %v392 = vunpack.c.h.bf16 %v379
      %v393 = vunpack.c.l.bf16 %v380
      %v394 = vunpack.c.h.bf16 %v380
      %v398 = vunpack.c.l.b16 %v378
      %v399 = vunpack.c.h.b16 %v378
      %v400 = vunpack.c.l.b16 %v379
      %v401 = vunpack.c.h.b16 %v379
      %v402 = vunpack.c.l.b16 %v380
      %v403 = vunpack.c.h.b16 %v380
      %v404 = vpack.c.b16 %v400, %v398
      %v405 = vpack.c.b16 %v401, %v399
      %v406 = vpack.c.b16 %v402, %v402
      %v407 = vpack.c.b16 %v403, %v403
      %412 = vmatprep.subr.bf16.mxu0 %v321
      %413 = vmatpush1.bf16.msra.mxu0 %v320
      %414 = vmatprep.subr.bf16.mxu0 %v323
      %415 = vmatpush1.bf16.msra.mxu0 %v322
      %416 = vmatprep.subr.bf16.mxu0 %v325
      %417 = vmatpush1.bf16.msra.mxu0 %v324
      %418 = vmatprep.subr.bf16.mxu0 %v327
      %419 = vmatpush1.bf16.msra.mxu0 %v326
      %420 = vmatprep.subr.bf16.mxu0 %v329
      %421 = vmatpush1.bf16.msra.mxu0 %v328
      %422 = vmatprep.subr.bf16.mxu0 %v331
      %423 = vmatpush1.bf16.msra.mxu0 %v330
      %424 = vmatprep.subr.bf16.mxu0 %v333
      %425 = vmatpush1.bf16.msra.mxu0 %v332
      %426 = vmatprep.subr.bf16.mxu0 %v335
      %427 = vmatpush1.bf16.msra.mxu0 %v334
      %428 = vmatprep.subr.bf16.mxu0 %v337
      %429 = vmatpush1.bf16.msra.mxu0 %v336
      %430 = vmatprep.subr.bf16.mxu0 %v339
      %431 = vmatpush1.bf16.msra.mxu0 %v338
      %432 = vmatprep.subr.bf16.mxu0 %v341
      %433 = vmatpush1.bf16.msra.mxu0 %v340
      %434 = vmatprep.subr.bf16.mxu0 %v343
      %435 = vmatpush1.bf16.msra.mxu0 %v342
      %436 = vmatprep.subr.bf16.mxu0 %v345
      %437 = vmatpush1.bf16.msra.mxu0 %v344
      %438 = vmatprep.subr.bf16.mxu0 %v347
      %439 = vmatpush1.bf16.msra.mxu0 %v346
      %440 = vmatprep.subr.bf16.mxu0 %v349
      %441 = vmatpush1.bf16.msra.mxu0 %v348
      %442 = vmatprep.subr.bf16.mxu0 %v351
      %443 = vmatpush1.bf16.msra.mxu0 %v350
      %444 = vmatprep.mubr.bf16.mxu0 %v405
      %445 = vmatmul.mubr.bf16.gmra.mrb[0].mxu0 %v404
      %v446 = vpop.f32.mrb[0].mxu0
      %v447 = vadd.f32 0.0, %v446
      %v448 = vpop.f32.mrb[0].mxu0
      %v449 = vadd.f32 0.0, %v448
      %v450 = vpop.f32.mrb[0].mxu0
      %v451 = vadd.f32 0.0, %v450
      %v452 = vpop.f32.mrb[0].mxu0
      %v453 = vadd.f32 0.0, %v452
      %454 = vmatprep.mubr.bf16.mxu0 %v407
      %455 = vmatmul.mubr.bf16.gmra.mrb[0].mxu0 %v406
      %v456 = vpop.f32.mrb[0].mxu0
      %v457 = vadd.f32 0.0, %v456
      %v458 = vpop.f32.mrb[0].mxu0
      %v459 = vadd.f32 0.0, %v458
      %v460 = vpop.f32.mrb[0].mxu0
      %v461 = vpop.f32.mrb[0].mxu0
      %462 = vdwg.mxu0
      %464 = vset.pattern.permute.xlu0 0
      %465 = vperm.xlu0 %464, %v367
      %v466 = vpop.permute.xlu0 %465
      %469 = vset.pattern.permute.xlu0 0
      %470 = vperm.xlu0 %469, %v368
      %v471 = vpop.permute.xlu0 %470
      %474 = vset.pattern.permute.xlu0 0
      %475 = vperm.xlu0 %474, %v369
      %v476 = vpop.permute.xlu0 %475
      %v478 = vadd.f32 %v466, %v447
      %v479 = vadd.f32 %v466, %v449
      %v480 = vadd.f32 %v471, %v451
      %v481 = vadd.f32 %v471, %v453
      %v482 = vadd.f32 %v476, %v457
      %v483 = vadd.f32 %v476, %v459
      %v484 = vsub.f32 %v478, %v389
      %v485 = vsub.f32 %v479, %v390
      %v486 = vsub.f32 %v480, %v391
      %v487 = vsub.f32 %v481, %v392
      %v488 = vsub.f32 %v482, %v393
      %v489 = vsub.f32 %v483, %v394
      %s490 = smul.u32 0, 512
      %s491 = sadd.s32 %s490, %s373
      %v492 = vstv %s491
      %v493 = vadd.s32 %v492, %v353
      %v494 = vadd.s32 %v492, %v354
      %v495 = vcvt.s32.f32 %v493
      %v496 = vcvt.s32.f32 %v494
      %498 = vset.pattern.permute.xlu0 0
      %499 = vperm.xlu0 %498, %v317
      %v500 = vpop.permute.xlu0 %499
      %503 = vset.pattern.permute.xlu0 0
      %504 = vperm.xlu0 %503, %v318
      %v505 = vpop.permute.xlu0 %504
      %508 = vset.pattern.permute.xlu0 0
      %509 = vperm.xlu0 %508, %v319
      %v510 = vpop.permute.xlu0 %509
      %v512 = vsub.f32 %v500, %v484
      %v513 = vsub.f32 %v500, %v485
      %v514 = vsub.f32 %v505, %v486
      %v515 = vsub.f32 %v505, %v487
      %v516 = vsub.f32 %v510, %v488
      %v517 = vsub.f32 %v510, %v489
      %v518 = vadd.f32 %v512, %v495
      %v519 = vadd.f32 %v513, %v496
      %v520 = vadd.f32 %v514, %v495
      %v521 = vadd.f32 %v515, %v496
      %v522 = vadd.f32 %v516, %v495
      %v523 = vadd.f32 %v517, %v496
      %v524 = vadd.f32 %v518, 1.0
      %v525 = vadd.f32 %v519, 1.0
      %v526 = vadd.f32 %v520, 1.0
      %v527 = vadd.f32 %v521, 1.0
      %v528 = vadd.f32 %v522, 1.0
      %v529 = vadd.f32 %v523, 1.0
      %v530 = vmul.f32 %v518, %v524
      %v531 = vmul.f32 %v519, %v525
      %v532 = vmul.f32 %v520, %v526
      %v533 = vmul.f32 %v521, %v527
      %v534 = vmul.f32 %v522, %v528
      %v535 = vmul.f32 %v523, %v529
      %v536 = vmax.f32 %v530, 1.0
      %v537 = vmax.f32 %v531, 1.0
      %v538 = vmax.f32 %v532, 1.0
      %v539 = vmax.f32 %v533, 1.0
      %v540 = vmax.f32 %v534, 1.0
      %v541 = vmax.f32 %v535, 1.0
      %v542 = vadd.f32 %v495, 1.0
      %v543 = vadd.f32 %v496, 1.0
      %v544 = vmul.f32 %v389, %v542
      %v545 = vmul.f32 %v390, %v543
      %v546 = vmul.f32 %v391, %v542
      %v547 = vmul.f32 %v392, %v543
      %v548 = vmul.f32 %v393, %v542
      %v549 = vmul.f32 %v394, %v543
      %v550 = vadd.f32 %v512, %v544
      %v551 = vadd.f32 %v513, %v545
      %v552 = vadd.f32 %v514, %v546
      %v553 = vadd.f32 %v515, %v547
      %v554 = vadd.f32 %v516, %v548
      %v555 = vadd.f32 %v517, %v549
      %v556 = vrcp.pop %v536
      %v557 = vmul.f32 %v550, %v556
      %v558 = vrcp.pop %v537
      %v559 = vmul.f32 %v551, %v558
      %v560 = vrcp.pop %v538
      %v561 = vmul.f32 %v552, %v560
      %v562 = vrcp.pop %v539
      %v563 = vmul.f32 %v553, %v562
      %v564 = vrcp.pop %v540
      %v565 = vmul.f32 %v554, %v564
      %v566 = vrcp.pop %v541
      %v567 = vmul.f32 %v555, %v566
      %vm568 = vcmp.eq.f32.partialorder %v495, 0.0
      %vm569 = vcmp.eq.f32.partialorder %v496, 0.0
      %v570 = vsel %vm568, 1, 0
      %v571 = vsel %vm569, 1, 0
      %vm572 = vcmp.eq.s32.totalorder %v570, 1
      %vm573 = vcmp.eq.s32.totalorder %v571, 1
      %v574 = vsel %vm355, 1, 0
      %v575 = vsel %vm356, 1, 0
      %v576 = vsel %vm357, 1, 0
      %577 = vset.pattern.permute.xlu0 0
      %578 = vperm.xlu0 %577, %v574
      %v579 = vpop.permute.xlu0 %578
      %580 = vset.pattern.permute.xlu0 0
      %581 = vperm.xlu0 %580, %v575
      %v582 = vpop.permute.xlu0 %581
      %583 = vset.pattern.permute.xlu0 0
      %584 = vperm.xlu0 %583, %v576
      %v585 = vpop.permute.xlu0 %584
      %vm586 = vcmp.eq.s32.totalorder %v579, 1
      %vm587 = vcmp.eq.s32.totalorder %v582, 1
      %vm588 = vcmp.eq.s32.totalorder %v585, 1
      %vm589 = vmand %vm572, %vm586
      %vm590 = vmand %vm573, %vm586
      %vm591 = vmand %vm572, %vm587
      %vm592 = vmand %vm573, %vm587
      %vm593 = vmand %vm572, %vm588
      %vm594 = vmand %vm573, %vm588
      %v595 = vsel %vm589, 1.0, %v557
      %v596 = vsel %vm590, 1.0, %v559
      %v597 = vsel %vm591, 1.0, %v561
      %v598 = vsel %vm592, 1.0, %v563
      %v599 = vsel %vm593, 1.0, %v565
      %v600 = vsel %vm594, 1.0, %v567
      %v601 = vmul.f32 %v383, %v595
      %v602 = vmul.f32 %v384, %v596
      %v603 = vmul.f32 %v385, %v597
      %v604 = vmul.f32 %v386, %v598
      %v605 = vmul.f32 %v387, %v599
      %v606 = vmul.f32 %v388, %v600
      %v607 = vadd.f32 %v601, %v602
      %608 = vadd.xlane.f32.xlu0 %v607
      %v609 = vpop.xlane.xlu0 %608
      %v610 = vadd.f32 %v603, %v604
      %611 = vadd.xlane.f32.xlu0 %v610
      %v612 = vpop.xlane.xlu0 %611
      %vm613 = vcmask 1043456
      %v614 = vsel %vm613, %v605, 0.0
      %v615 = vsel %vm613, %v606, 0.0
      %v616 = vadd.f32 %v614, %v615
      %617 = vadd.xlane.f32.xlu0 %v616
      %v618 = vpop.xlane.xlu0 %617
      %v619 = vadd.f32 %v370, %v609
      %v620 = vadd.f32 %v371, %v612
      %v621 = vadd.f32 %v372, %v618
      %625 = vrot.lane.b32.xlu0 %v479, 1
      %v626 = vpop.permute.xlu0 %625
      %627 = vrot.lane.b32.xlu0 %v481, 1
      %v628 = vpop.permute.xlu0 %627
      %629 = vrot.lane.b32.xlu0 %v483, 1
      %v630 = vpop.permute.xlu0 %629
    $region22: #{lovasz_softmax_loss.3} parent=1 // loop_footer
      %s366 = sadd.s32 1, %s362
    $region23: #{lovasz_softmax_loss.3} parent=1 // loop_footer_branch
      %361 = sbr.rel target = $region19
    $region24: #{lovasz_softmax_loss.3} parent=1 // loop_exit
      _
    %vm634 = vcmask 7168
    %635 = vst.msk [vmem:[#allocation2] sm:$0xff] %vm634, %v367
    %636 = vst.msk [vmem:[#allocation2 + $0x8] sm:$0xff] %vm634, %v368
    %vm637 = vcmask 3072
    %638 = vst.msk [vmem:[#allocation2 + $0x10] sm:$0xf] %vm637, %v369
    %v639 = vld [vmem:[#allocation3] sm:$0xff]
    %v640 = vld [vmem:[#allocation3 + $0x8] sm:$0xff]
    %v641 = vld [vmem:[#allocation3 + $0x10] sm:$0xf]
    %v642 = vadd.f32 %v639, %v370
    %v643 = vadd.f32 %v640, %v371
    %v644 = vadd.f32 %v641, %v372
    %645 = vst.msk [vmem:[#allocation3] sm:$0xff] %vm634, %v642
    %646 = vst.msk [vmem:[#allocation3 + $0x8] sm:$0xff] %vm634, %v643
    %647 = vst.msk [vmem:[#allocation3 + $0x10] sm:$0xf] %vm637, %v644
    // Predicated region
    $region25: #{lovasz_softmax_loss.3} parent=1 // pred_check
      %p648 = pneg %p15
    $region26: #{lovasz_softmax_loss.3} parent=1 // pred_check_branch
      %650 = sbr.rel (%p648) target = $region28
    $region27: #{lovasz_softmax_loss.3} parent=1 // pred_region
      %v651 = vld [vmem:[#allocation3] sm:$0xff]
      %v652 = vld [vmem:[#allocation3 + $0x8] sm:$0xff]
      %v653 = vld [vmem:[#allocation3 + $0x10] sm:$0xf]
      %v654 = vsel %vm634, %v651, 0.0
      %v655 = vsel %vm634, %v652, 0.0
      %v656 = vadd.f32 %v654, %v655
      %v657 = vsel %vm637, %v653, 0.0
      %v658 = vadd.f32 %v656, %v657
      %v659 = vrot.slane %v658, 4
      %v660 = vadd.f32 %v658, %v659
      %v661 = vrot.slane %v660, 2
      %v662 = vadd.f32 %v660, %v661
      %v663 = vrot.slane %v662, 1
      %v664 = vadd.f32 %v662, %v663
      %v665 = vsub.f32 0.0, %v664
      %v666 = vmul.f32 %v665, 0.05
      %vm667 = vcmask 0
      %668 = vst.msk [vmem:[#allocation5] sm:$0x1] %vm667, %v666
    $region28: #{lovasz_softmax_loss.3} parent=1 // pred_fallthru
      _
    // Predicated region
    $region29: #{lovasz_softmax_loss.3} parent=1 // pred_check
      _
    $region30: #{lovasz_softmax_loss.3} parent=1 // pred_check_branch
      %670 = sbr.rel (0) target = $region32
    $region31: #{lovasz_softmax_loss.3} parent=1 // pred_region
      %s672 = ssub.s32 16, 16
      %673 = vsyncadd [#allocation6], %s672
      %s675 = sshll.u32 [#allocation5], 4
      %s676 = int_to_ptr.vmem [resolvable:$true] %s675
      %678 = dma.vmem_to_hbm [thread:$0]  %s676, 16, %s3, [#allocation6]
    $region32: #{lovasz_softmax_loss.3} parent=1 // pred_fallthru
      _
    // Predicated region
    $region33: #{lovasz_softmax_loss.3} parent=1 // pred_check
      _
    $region34: #{lovasz_softmax_loss.3} parent=1 // pred_check_branch
      %680 = sbr.rel (0) target = $region36
    $region35: #{lovasz_softmax_loss.3} parent=1 // pred_region
      %681 = dma.done [#allocation6], 16
    $region36: #{lovasz_softmax_loss.3} parent=1 // pred_fallthru
      _
    %682 = vsyncpa [#allocation6], 1

</llo_original>
